<compile_context>
chip_gen: v6e
topology: v6e:2x2x1
jax: 0.10.0
libtpu: 0.0.40
codegen_flags: <defaults>
</compile_context>

<pallas_src>
import functools

import jax
import jax.numpy as jnp
from jax import lax
from jax.experimental import pallas as pl
from jax.experimental.pallas import tpu as pltpu

N_CLASSES = 20
CP = 128          # class dimension padded to one full lane group


# --------------------------------------------------------------------------
# Plain-JAX ResNet-50 backbone (stage1..stage4), strides=(2,2,2,1) -> /16.
# NHWC throughout so the 2048-channel feature is already channels-last.
# --------------------------------------------------------------------------
def _he_conv(key, kh, kw, in_c, out_c):
    std = (2.0 / (in_c * kh * kw)) ** 0.5
    return jax.random.normal(key, (kh, kw, in_c, out_c), jnp.float32) * std


def _conv2d(x, w, stride=1, padding=0):
    return lax.conv_general_dilated(
        x, w,
        window_strides=(stride, stride),
        padding=[(padding, padding), (padding, padding)],
        dimension_numbers=("NHWC", "HWIO", "NHWC"))


def _maxpool_3x3_s2(x):
    return lax.reduce_window(
        x, -jnp.inf, lax.max,
        window_dimensions=(1, 3, 3, 1),
        window_strides=(1, 2, 2, 1),
        padding=[(0, 0), (1, 1), (1, 1), (0, 0)])


def _init_bottleneck(key, in_c, planes, downsample):
    k1, k2, k3, k4 = jax.random.split(key, 4)
    p = {
        "w1": _he_conv(k1, 1, 1, in_c, planes),
        "w2": _he_conv(k2, 3, 3, planes, planes),
        "w3": _he_conv(k3, 1, 1, planes, planes * 4),
    }
    if downsample:
        p["wd"] = _he_conv(k4, 1, 1, in_c, planes * 4)
    return p


def _init_layer(key, in_c, planes, n_blocks, stride):
    keys = jax.random.split(key, n_blocks)
    blocks = [_init_bottleneck(keys[0], in_c, planes,
                               downsample=(stride != 1 or in_c != planes * 4))]
    for i in range(1, n_blocks):
        blocks.append(_init_bottleneck(keys[i], planes * 4, planes, downsample=False))
    return blocks


def _bottleneck_fwd(x, p, stride):
    out = jax.nn.relu(_conv2d(x, p["w1"]))                              # 1x1 (BN==identity)
    out = jax.nn.relu(_conv2d(out, p["w2"], stride=stride, padding=1))  # 3x3
    out = _conv2d(out, p["w3"])                                         # 1x1
    identity = _conv2d(x, p["wd"], stride=stride) if "wd" in p else x
    return jax.nn.relu(out + identity)


def _layer_fwd(x, blocks, stride):
    x = _bottleneck_fwd(x, blocks[0], stride)
    for p in blocks[1:]:
        x = _bottleneck_fwd(x, p, 1)
    return x


def init_params(key, n_classes=N_CLASSES):
    ks = jax.random.split(key, 7)
    return {
        "conv1":  _he_conv(ks[0], 7, 7, 3, 64),
        "layer1": _init_layer(ks[1], 64, 64, 3, 1),
        "layer2": _init_layer(ks[2], 256, 128, 4, 2),
        "layer3": _init_layer(ks[3], 512, 256, 6, 2),
        "layer4": _init_layer(ks[4], 1024, 512, 3, 1),     # strides=(2,2,2,1)
        # nn.Conv2d(2048, n_classes, 1, bias=False) weights, squeezed to (C, 2048)
        "w_cls1": jax.random.normal(ks[5], (n_classes, 2048), jnp.float32) * 0.01,
        "w_cls2": jax.random.normal(ks[6], (n_classes, 2048), jnp.float32) * 0.01,
    }


def backbone_fwd(x_nchw, params):
    x = jnp.transpose(x_nchw, (0, 2, 3, 1))                   # tiny 3-channel transpose
    x = jax.nn.relu(_conv2d(x, params["conv1"], stride=2, padding=3))
    x = _maxpool_3x3_s2(x)
    x = _layer_fwd(x, params["layer1"], 1)
    x = _layer_fwd(x, params["layer2"], 2)
    x = _layer_fwd(x, params["layer3"], 2)
    x = _layer_fwd(x, params["layer4"], 1)
    return x                                 # (B, H/16, W/16, 2048) NHWC


# --------------------------------------------------------------------------
# Pallas kernel: DCAM-SCE head hot path. One grid step handles `bt` images.
# --------------------------------------------------------------------------
def _dcam_sce_kernel(feat_ref, wcat_ref, logits_ref, logits2_ref, *, bt, cp):
    hw = feat_ref.shape[1]
    k = feat_ref.shape[2]
    inv_hw = 1.0 / hw
    w = wcat_ref[...]                                    # (K, 2*CP) bf16

    if bt == 1 or hw % 8 == 0:
        # --- fused path: one big MXU stream over the whole batch tile -----
        f2d = feat_ref[...].reshape(bt * hw, k)          # contiguous flatten (layout no-op)
        packed = jnp.dot(f2d, w,
                         preferred_element_type=jnp.float32)     # (bt*HW, 2*CP) f32
        packed = packed.reshape(bt, hw, 2 * cp)
        scores = packed[:, :, :cp]                       # (bt, HW, CP)  = f @ w1^T
        s2 = packed[:, :, cp:]                           # (bt, HW, CP)  = f @ w2^T

        # gap2d(feature) -> classifier  ==  mean over HW of scores (linear)
        logits_ref[...] = jnp.mean(scores, axis=1, keepdims=True)       # (bt, 1, CP)

        # cams = relu(conv2d(feature, classifier.weight)); normalize by spatial max
        cams = jnp.maximum(scores, 0.0)
        cmax = jnp.max(cams, axis=1, keepdims=True)                     # (bt, 1, CP)
        cams = cams * pl.reciprocal(cmax + 1e-5, approx=True)

        # logits2[b,c,c'] = (1/HW) * sum_h cams[b,h,c] * s2[b,h,c']
        #               == ((cams^T @ f) / HW) @ classifier2.weight^T   (exact identity)
        logits2_ref[...] = lax.dot_general(
            cams.astype(jnp.bfloat16), s2.astype(jnp.bfloat16),
            (((1,), (1,)), ((0,), (0,))),
            preferred_element_type=jnp.float32) * inv_hw                # (bt, CP, CP)
    else:
        # --- per-image fallback (HW not sublane aligned) -------------------
        for b in range(bt):                              # static unroll, bt is small
            fb = feat_ref[b]                             # (HW, K) bf16
            packed = jnp.dot(fb, w, preferred_element_type=jnp.float32)
            scores = packed[:, :cp]
            s2 = packed[:, cp:]

            logits_ref[b] = jnp.mean(scores, axis=0, keepdims=True)

            cams = jnp.maximum(scores, 0.0)
            cmax = jnp.max(cams, axis=0, keepdims=True)
            cams = cams * pl.reciprocal(cmax + 1e-5, approx=True)

            logits2_ref[b] = lax.dot_general(
                cams.astype(jnp.bfloat16), s2.astype(jnp.bfloat16),
                (((0,), (0,)), ((), ())),
                preferred_element_type=jnp.float32) * inv_hw


def _pick_batch_tile(B, HW, K):
    # Largest divisor of B whose bf16 feature slab stays well inside scoped
    # VMEM (double-buffered by the pipeline); keeps v7x's 64 MiB safe.
    per_image_bytes = HW * K * 2
    budget = 12 * 1024 * 1024
    bt = B
    while bt > 1 and bt * per_image_bytes > budget:
        bt -= 1
        while B % bt:
            bt -= 1
    return bt


def dcam_sce_head(feature, w1, w2):
    B, H, W, K = feature.shape
    HW = H * W
    C = w1.shape[0]
    assert C <= CP

    # channels-last feature, free reshape, bf16 at the kernel boundary
    feat = feature.reshape(B, HW, K).astype(jnp.bfloat16)

    # Pack both classifier weights into one lane-dense (K, 2*CP) bf16 matrix:
    # lanes [0:C) = classifier^T, lanes [CP:CP+C) = classifier2^T, rest zero.
    wcat = jnp.zeros((K, 2 * CP), jnp.bfloat16)
    wcat = wcat.at[:, :C].set(w1.T.astype(jnp.bfloat16))
    wcat = wcat.at[:, CP:CP + C].set(w2.T.astype(jnp.bfloat16))

    bt = _pick_batch_tile(B, HW, K)
    grid = (B // bt,)
    kernel = functools.partial(_dcam_sce_kernel, bt=bt, cp=CP)

    logits_pad, logits2_pad = pl.pallas_call(
        kernel,
        out_shape=(jax.ShapeDtypeStruct((B, 1, CP), jnp.float32),
                   jax.ShapeDtypeStruct((B, CP, CP), jnp.float32)),
        grid_spec=pltpu.PrefetchScalarGridSpec(
            num_scalar_prefetch=0,
            grid=grid,
            in_specs=[
                pl.BlockSpec((bt, HW, K), lambda b: (b, 0, 0)),
                pl.BlockSpec((K, 2 * CP), lambda b: (0, 0)),
            ],
            out_specs=[
                pl.BlockSpec((bt, 1, CP), lambda b: (b, 0, 0)),
                pl.BlockSpec((bt, CP, CP), lambda b: (b, 0, 0)),
            ]),
        compiler_params=pltpu.CompilerParams(
            dimension_semantics=("parallel",),
            vmem_limit_bytes=48 * 1024 * 1024),
    )(feat, wcat)

    # slice the zero-padded class lanes back to the real 20 classes BEFORE any
    # softmax/argmax downstream.
    logits_cls = logits_pad[:, 0, :C]                    # x.view(-1, n_classes)
    logits2 = logits2_pad[:, :C, :C]                     # per-class classifier2 logits
    return logits_cls, logits2


# --------------------------------------------------------------------------
# Full DCAM_SCE.forward(x, label) -> (loss_cls, loss_ce, acc)
# --------------------------------------------------------------------------
def dcam_sce_forward(x, label, params):
    feature = backbone_fwd(x, params)
    _logits_cls, logits2 = dcam_sce_head(feature, params["w_cls1"], params["w_cls2"])
    B, C = label.shape

    loss_cls = jnp.float32(0.0)                       # torch.tensor(0.0)

    mask = label > 0                                  # (B, C)
    n_i = jnp.sum(mask, axis=1)                       # positives per image

    # per-image cross entropy: rows = present classes, target = class index
    logp = jax.nn.log_softmax(logits2, axis=-1)       # (B, C, C)
    ce_diag = -jnp.diagonal(logp, axis1=1, axis2=2)   # (B, C)  CE(logit_c, target=c)
    ce_b = jnp.sum(jnp.where(mask, ce_diag, 0.0), axis=1) / jnp.maximum(n_i, 1)
    ce_b = jnp.where(n_i > 0, ce_b, 0.0)
    loss_ce = jnp.sum(ce_b) / B

    pred = jnp.argmax(logits2, axis=-1)               # (B, C)
    hits = (pred == jnp.arange(C)[None, :]).astype(jnp.float32)
    correct = jnp.sum(jnp.where(mask, hits, 0.0))
    num = jnp.sum(n_i).astype(jnp.float32)
    acc = correct / num
    return loss_cls, loss_ce, acc


if __name__ == "__main__":
    key = jax.random.PRNGKey(0)
    kp, kx, kl = jax.random.split(key, 3)

    params = init_params(kp, n_classes=N_CLASSES)

    # small image batch: (B=2, 3, 64, 64) -> feature (2, 4, 4, 2048) NHWC
    x = jax.random.normal(kx, (2, 3, 64, 64), jnp.float32)
    # multi-hot labels (B, 20), at least one positive per image
    label = (jax.random.uniform(kl, (2, N_CLASSES)) < 0.3).astype(jnp.float32)
    label = label.at[:, 0].set(1.0)

    fwd = jax.jit(functools.partial(dcam_sce_forward, params=params))
    loss_cls, loss_ce, acc = fwd(x, label)
    jax.block_until_ready((loss_cls, loss_ce, acc))
    print("KERNEL_OK")
</pallas_src>

<mosaic_0001>
module attributes {stable_mosaic.version = 11 : i64} {
  func.func @_dcam_sce_kernel(%arg0: i32, %arg1: memref<2x16x2048xbf16, #tpu.memory_space<vmem>>, %arg2: memref<2048x256xbf16, #tpu.memory_space<vmem>>, %arg3: memref<2x1x128xf32, #tpu.memory_space<vmem>>, %arg4: memref<2x128x128xf32, #tpu.memory_space<vmem>>) attributes {dimension_semantics = [#tpu.dimension_semantics<parallel>], iteration_bounds = array<i64: 1>, scalar_prefetch = 0 : i64, scratch_operands = 0 : i64, tpu.core_type = #tpu.core_type<tc>, window_params = [{transform_indices = @transform_0, window_bounds = array<i64: 2, 16, 2048>}, {pipeline_mode = #tpu.pipeline_mode<synchronous>, transform_indices = @transform_1, window_bounds = array<i64: 2048, 256>}, {transform_indices = @transform_2, window_bounds = array<i64: 2, 1, 128>}, {transform_indices = @transform_3, window_bounds = array<i64: 2, 128, 128>}]} {
    %c0 = arith.constant 0 : index
    %c0_0 = arith.constant 0 : index
    %0 = vector.load %arg2[%c0, %c0_0] : memref<2048x256xbf16, #tpu.memory_space<vmem>>, vector<2048x256xbf16>
    %c0_1 = arith.constant 0 : index
    %c0_2 = arith.constant 0 : index
    %c0_3 = arith.constant 0 : index
    %1 = vector.load %arg1[%c0_1, %c0_2, %c0_3] : memref<2x16x2048xbf16, #tpu.memory_space<vmem>>, vector<2x16x2048xbf16>
    %2 = vector.shape_cast %1 : vector<2x16x2048xbf16> to vector<32x2048xbf16>
    %cst = arith.constant dense<0.000000e+00> : vector<32x256xf32>
    %3 = tpu.matmul %2, %0, %cst {dimension_numbers = #tpu.dot_dimension_numbers<[1], [0], [0], [1], [0, 0, 1, 1], [], []>} : vector<32x2048xbf16>, vector<2048x256xbf16>, vector<32x256xf32> -> vector<32x256xf32>
    %4 = vector.shape_cast %3 : vector<32x256xf32> to vector<2x16x256xf32>
    %5 = vector.extract_strided_slice %4 {offsets = [0, 0, 0], sizes = [2, 16, 128], strides = [1, 1, 1]} : vector<2x16x256xf32> to vector<2x16x128xf32>
    %6 = vector.extract_strided_slice %4 {offsets = [0, 0, 128], sizes = [2, 16, 128], strides = [1, 1, 1]} : vector<2x16x256xf32> to vector<2x16x128xf32>
    %cst_4 = arith.constant dense<0.000000e+00> : vector<2x128xf32>
    %7 = vector.multi_reduction <add>, %5, %cst_4 [1] : vector<2x16x128xf32> to vector<2x128xf32>
    %8 = vector.shape_cast %7 : vector<2x128xf32> to vector<2x1x128xf32>
    %cst_5 = arith.constant 1.600000e+01 : f32
    %9 = vector.broadcast %cst_5 : f32 to vector<2x1x128xf32>
    %10 = arith.divf %8, %9 : vector<2x1x128xf32>
    %c0_6 = arith.constant 0 : index
    %c0_7 = arith.constant 0 : index
    %c0_8 = arith.constant 0 : index
    %11 = vector.load %arg3[%c0_6, %c0_7, %c0_8] : memref<2x1x128xf32, #tpu.memory_space<vmem>>, vector<2x1x128xf32>
    tpu.vector_store %arg3[%c0_6, %c0_7, %c0_8], %10 {strides = array<i32>} : memref<2x1x128xf32, #tpu.memory_space<vmem>>, vector<2x1x128xf32>,
    %cst_9 = arith.constant 0.000000e+00 : f32
    %12 = vector.broadcast %cst_9 : f32 to vector<2x16x128xf32>
    %13 = arith.maximumf %5, %12 : vector<2x16x128xf32>
    %cst_10 = arith.constant dense<0xFF800000> : vector<2x128xf32>
    %14 = vector.multi_reduction <maximumf>, %13, %cst_10 [1] : vector<2x16x128xf32> to vector<2x128xf32>
    %15 = vector.shape_cast %14 : vector<2x128xf32> to vector<2x1x128xf32>
    %cst_11 = arith.constant 9.99999974E-6 : f32
    %16 = vector.broadcast %cst_11 : f32 to vector<2x1x128xf32>
    %17 = arith.addf %15, %16 : vector<2x1x128xf32>
    %18 = tpu.reciprocal %17 {approx = true} : vector<2x1x128xf32> -> vector<2x1x128xf32>
    %19 = vector.broadcast %18 : vector<2x1x128xf32> to vector<2x16x128xf32>
    %20 = arith.mulf %13, %19 : vector<2x16x128xf32>
    %21 = arith.truncf %20 : vector<2x16x128xf32> to vector<2x16x128xbf16>
    %22 = arith.truncf %6 : vector<2x16x128xf32> to vector<2x16x128xbf16>
    %cst_12 = arith.constant dense<0.000000e+00> : vector<2x128x128xf32>
    %23 = tpu.matmul %21, %22, %cst_12 {dimension_numbers = #tpu.dot_dimension_numbers<[1], [1], [2], [2], [0, 0, 0, 2, 1, 2], [0], [0]>} : vector<2x16x128xbf16>, vector<2x16x128xbf16>, vector<2x128x128xf32> -> vector<2x128x128xf32>
    %cst_13 = arith.constant 6.250000e-02 : f32
    %24 = vector.broadcast %cst_13 : f32 to vector<2x128x128xf32>
    %25 = arith.mulf %23, %24 : vector<2x128x128xf32>
    %c0_14 = arith.constant 0 : index
    %c0_15 = arith.constant 0 : index
    %c0_16 = arith.constant 0 : index
    %26 = vector.load %arg4[%c0_14, %c0_15, %c0_16] : memref<2x128x128xf32, #tpu.memory_space<vmem>>, vector<2x128x128xf32>
    tpu.vector_store %arg4[%c0_14, %c0_15, %c0_16], %25 {strides = array<i32>} : memref<2x128x128xf32, #tpu.memory_space<vmem>>, vector<2x128x128xf32>,
    return
  }
  func.func @transform_0(%arg0: i32) -> (i32, i32, i32) {
    %c0_i32 = arith.constant 0 : i32
    %c0_i32_0 = arith.constant 0 : i32
    %c0_i32_1 = arith.constant 0 : i32
    return %arg0, %c0_i32, %c0_i32_0 : i32, i32, i32
  }
  func.func @transform_1(%arg0: i32) -> (i32, i32) {
    %c0_i32 = arith.constant 0 : i32
    %c0_i32_0 = arith.constant 0 : i32
    %c0_i32_1 = arith.constant 0 : i32
    return %c0_i32, %c0_i32_0 : i32, i32
  }
  func.func @transform_2(%arg0: i32) -> (i32, i32, i32) {
    %c0_i32 = arith.constant 0 : i32
    %c0_i32_0 = arith.constant 0 : i32
    %c0_i32_1 = arith.constant 0 : i32
    return %arg0, %c0_i32, %c0_i32_0 : i32, i32, i32
  }
  func.func @transform_3(%arg0: i32) -> (i32, i32, i32) {
    %c0_i32 = arith.constant 0 : i32
    %c0_i32_0 = arith.constant 0 : i32
    %c0_i32_1 = arith.constant 0 : i32
    return %arg0, %c0_i32, %c0_i32_0 : i32, i32, i32
  }
}

</mosaic_0001>

<llo_original>
// kernel: dcam_sce_forward.1
$region0: #{dcam_sce_forward.1}
  #allocation0 [shape = 'u32[]', space=smem, size = 0x4, offset = 0x4, fixed_abs, tag = 'smem constant byte address 0x4 - core index']
  #allocation1 [shape = 'u32[144,128]{1,0:T(1,128)}', space=vmem, size = 0x12000, scoped, tag = 'internal scratch']
  %s0 = inlined_call_operand.vmem [shape: bf16[2,16,2048], index: 0, kind: input, shape index: {}]
  %s1 = inlined_call_operand.vmem [shape: bf16[2048,256], index: 1, kind: input, shape index: {}]
  %s2 = inlined_call_operand.hbm [shape: f32[2,1,128], index: 2, kind: output, shape index: {0}]
  %s3 = inlined_call_operand.vmem [shape: f32[2,128,128], index: 3, kind: output, shape index: {1}]
  %4 = xla_tuple %s2, %s3
  %s5 = sld [smem:[#allocation0]]
  $region26: #{dcam_sce_forward.1} parent=0
    _
  %s7 = ssub.s32 1, %s5
  %s8 = scalar_select 0, %s7, %s5
  $region1: #{dcam_sce_forward.1} parent=0
    #allocation2 [shape = 'u8[1024]{0}', space=vmem, size = 0x400, scoped, tag = 'output window, operand 0, single buffered']
    #allocation3 [shape = 's32[1]{0}', space=sflag, size = 0x4, scoped, tag = 'scoped memory for dcam_sce_forward.1']
    %9 = vsyncpa [#allocation3], 0
    // Predicated region
    $region2: #{dcam_sce_forward.1} parent=1 // pred_check
      _
    $region3: #{dcam_sce_forward.1} parent=1 // pred_check_branch
      %11 = sbr.rel (0) target = $region5
    $region4: #{dcam_sce_forward.1} parent=1 // pred_region
      _
    $region5: #{dcam_sce_forward.1} parent=1 // pred_fallthru
      _
    // Predicated region
    $region6: #{dcam_sce_forward.1} parent=1 // pred_check
      _
    $region7: #{dcam_sce_forward.1} parent=1 // pred_check_branch
      %13 = sbr.rel (0) target = $region9
    $region8: #{dcam_sce_forward.1} parent=1 // pred_region
      _
    $region9: #{dcam_sce_forward.1} parent=1 // pred_fallthru
      _
    %v15 = vld [vmem:[%s1] sm:$0xff]
    %v16 = vld [vmem:[%s1 + $0x8] sm:$0xff]
    %v17 = vld [vmem:[%s1 + $0x10] sm:$0xff]
    %v18 = vld [vmem:[%s1 + $0x18] sm:$0xff]
    %v19 = vld [vmem:[%s1 + $0x20] sm:$0xff]
    %v20 = vld [vmem:[%s1 + $0x28] sm:$0xff]
    %v21 = vld [vmem:[%s1 + $0x30] sm:$0xff]
    %v22 = vld [vmem:[%s1 + $0x38] sm:$0xff]
    %v23 = vld [vmem:[%s1 + $0x40] sm:$0xff]
    %v24 = vld [vmem:[%s1 + $0x48] sm:$0xff]
    %v25 = vld [vmem:[%s1 + $0x50] sm:$0xff]
    %v26 = vld [vmem:[%s1 + $0x58] sm:$0xff]
    %v27 = vld [vmem:[%s1 + $0x60] sm:$0xff]
    %v28 = vld [vmem:[%s1 + $0x68] sm:$0xff]
    %v29 = vld [vmem:[%s1 + $0x70] sm:$0xff]
    %v30 = vld [vmem:[%s1 + $0x78] sm:$0xff]
    %v31 = vld [vmem:[%s1 + $0x80] sm:$0xff]
    %v32 = vld [vmem:[%s1 + $0x88] sm:$0xff]
    %v33 = vld [vmem:[%s1 + $0x90] sm:$0xff]
    %v34 = vld [vmem:[%s1 + $0x98] sm:$0xff]
    %v35 = vld [vmem:[%s1 + $0xa0] sm:$0xff]
    %v36 = vld [vmem:[%s1 + $0xa8] sm:$0xff]
    %v37 = vld [vmem:[%s1 + $0xb0] sm:$0xff]
    %v38 = vld [vmem:[%s1 + $0xb8] sm:$0xff]
    %v39 = vld [vmem:[%s1 + $0xc0] sm:$0xff]
    %v40 = vld [vmem:[%s1 + $0xc8] sm:$0xff]
    %v41 = vld [vmem:[%s1 + $0xd0] sm:$0xff]
    %v42 = vld [vmem:[%s1 + $0xd8] sm:$0xff]
    %v43 = vld [vmem:[%s1 + $0xe0] sm:$0xff]
    %v44 = vld [vmem:[%s1 + $0xe8] sm:$0xff]
    %v45 = vld [vmem:[%s1 + $0xf0] sm:$0xff]
    %v46 = vld [vmem:[%s1 + $0xf8] sm:$0xff]
    %v47 = vld [vmem:[%s1 + $0x100] sm:$0xff]
    %v48 = vld [vmem:[%s1 + $0x108] sm:$0xff]
    %v49 = vld [vmem:[%s1 + $0x110] sm:$0xff]
    %v50 = vld [vmem:[%s1 + $0x118] sm:$0xff]
    %v51 = vld [vmem:[%s1 + $0x120] sm:$0xff]
    %v52 = vld [vmem:[%s1 + $0x128] sm:$0xff]
    %v53 = vld [vmem:[%s1 + $0x130] sm:$0xff]
    %v54 = vld [vmem:[%s1 + $0x138] sm:$0xff]
    %v55 = vld [vmem:[%s1 + $0x140] sm:$0xff]
    %v56 = vld [vmem:[%s1 + $0x148] sm:$0xff]
    %v57 = vld [vmem:[%s1 + $0x150] sm:$0xff]
    %v58 = vld [vmem:[%s1 + $0x158] sm:$0xff]
    %v59 = vld [vmem:[%s1 + $0x160] sm:$0xff]
    %v60 = vld [vmem:[%s1 + $0x168] sm:$0xff]
    %v61 = vld [vmem:[%s1 + $0x170] sm:$0xff]
    %v62 = vld [vmem:[%s1 + $0x178] sm:$0xff]
    %v63 = vld [vmem:[%s1 + $0x180] sm:$0xff]
    %v64 = vld [vmem:[%s1 + $0x188] sm:$0xff]
    %v65 = vld [vmem:[%s1 + $0x190] sm:$0xff]
    %v66 = vld [vmem:[%s1 + $0x198] sm:$0xff]
    %v67 = vld [vmem:[%s1 + $0x1a0] sm:$0xff]
    %v68 = vld [vmem:[%s1 + $0x1a8] sm:$0xff]
    %v69 = vld [vmem:[%s1 + $0x1b0] sm:$0xff]
    %v70 = vld [vmem:[%s1 + $0x1b8] sm:$0xff]
    %v71 = vld [vmem:[%s1 + $0x1c0] sm:$0xff]
    %v72 = vld [vmem:[%s1 + $0x1c8] sm:$0xff]
    %v73 = vld [vmem:[%s1 + $0x1d0] sm:$0xff]
    %v74 = vld [vmem:[%s1 + $0x1d8] sm:$0xff]
    %v75 = vld [vmem:[%s1 + $0x1e0] sm:$0xff]
    %v76 = vld [vmem:[%s1 + $0x1e8] sm:$0xff]
    %v77 = vld [vmem:[%s1 + $0x1f0] sm:$0xff]
    %v78 = vld [vmem:[%s1 + $0x1f8] sm:$0xff]
    %v79 = vld [vmem:[%s1 + $0x200] sm:$0xff]
    %v80 = vld [vmem:[%s1 + $0x208] sm:$0xff]
    %v81 = vld [vmem:[%s1 + $0x210] sm:$0xff]
    %v82 = vld [vmem:[%s1 + $0x218] sm:$0xff]
    %v83 = vld [vmem:[%s1 + $0x220] sm:$0xff]
    %v84 = vld [vmem:[%s1 + $0x228] sm:$0xff]
    %v85 = vld [vmem:[%s1 + $0x230] sm:$0xff]
    %v86 = vld [vmem:[%s1 + $0x238] sm:$0xff]
    %v87 = vld [vmem:[%s1 + $0x240] sm:$0xff]
    %v88 = vld [vmem:[%s1 + $0x248] sm:$0xff]
    %v89 = vld [vmem:[%s1 + $0x250] sm:$0xff]
    %v90 = vld [vmem:[%s1 + $0x258] sm:$0xff]
    %v91 = vld [vmem:[%s1 + $0x260] sm:$0xff]
    %v92 = vld [vmem:[%s1 + $0x268] sm:$0xff]
    %v93 = vld [vmem:[%s1 + $0x270] sm:$0xff]
    %v94 = vld [vmem:[%s1 + $0x278] sm:$0xff]
    %v95 = vld [vmem:[%s1 + $0x280] sm:$0xff]
    %v96 = vld [vmem:[%s1 + $0x288] sm:$0xff]
    %v97 = vld [vmem:[%s1 + $0x290] sm:$0xff]
    %v98 = vld [vmem:[%s1 + $0x298] sm:$0xff]
    %v99 = vld [vmem:[%s1 + $0x2a0] sm:$0xff]
    %v100 = vld [vmem:[%s1 + $0x2a8] sm:$0xff]
    %v101 = vld [vmem:[%s1 + $0x2b0] sm:$0xff]
    %v102 = vld [vmem:[%s1 + $0x2b8] sm:$0xff]
    %v103 = vld [vmem:[%s1 + $0x2c0] sm:$0xff]
    %v104 = vld [vmem:[%s1 + $0x2c8] sm:$0xff]
    %v105 = vld [vmem:[%s1 + $0x2d0] sm:$0xff]
    %v106 = vld [vmem:[%s1 + $0x2d8] sm:$0xff]
    %v107 = vld [vmem:[%s1 + $0x2e0] sm:$0xff]
    %v108 = vld [vmem:[%s1 + $0x2e8] sm:$0xff]
    %v109 = vld [vmem:[%s1 + $0x2f0] sm:$0xff]
    %v110 = vld [vmem:[%s1 + $0x2f8] sm:$0xff]
    %v111 = vld [vmem:[%s1 + $0x300] sm:$0xff]
    %v112 = vld [vmem:[%s1 + $0x308] sm:$0xff]
    %v113 = vld [vmem:[%s1 + $0x310] sm:$0xff]
    %v114 = vld [vmem:[%s1 + $0x318] sm:$0xff]
    %v115 = vld [vmem:[%s1 + $0x320] sm:$0xff]
    %v116 = vld [vmem:[%s1 + $0x328] sm:$0xff]
    %v117 = vld [vmem:[%s1 + $0x330] sm:$0xff]
    %v118 = vld [vmem:[%s1 + $0x338] sm:$0xff]
    %v119 = vld [vmem:[%s1 + $0x340] sm:$0xff]
    %v120 = vld [vmem:[%s1 + $0x348] sm:$0xff]
    %v121 = vld [vmem:[%s1 + $0x350] sm:$0xff]
    %v122 = vld [vmem:[%s1 + $0x358] sm:$0xff]
    %v123 = vld [vmem:[%s1 + $0x360] sm:$0xff]
    %v124 = vld [vmem:[%s1 + $0x368] sm:$0xff]
    %v125 = vld [vmem:[%s1 + $0x370] sm:$0xff]
    %v126 = vld [vmem:[%s1 + $0x378] sm:$0xff]
    %v127 = vld [vmem:[%s1 + $0x380] sm:$0xff]
    %v128 = vld [vmem:[%s1 + $0x388] sm:$0xff]
    %v129 = vld [vmem:[%s1 + $0x390] sm:$0xff]
    %v130 = vld [vmem:[%s1 + $0x398] sm:$0xff]
    %v131 = vld [vmem:[%s1 + $0x3a0] sm:$0xff]
    %v132 = vld [vmem:[%s1 + $0x3a8] sm:$0xff]
    %v133 = vld [vmem:[%s1 + $0x3b0] sm:$0xff]
    %v134 = vld [vmem:[%s1 + $0x3b8] sm:$0xff]
    %v135 = vld [vmem:[%s1 + $0x3c0] sm:$0xff]
    %v136 = vld [vmem:[%s1 + $0x3c8] sm:$0xff]
    %v137 = vld [vmem:[%s1 + $0x3d0] sm:$0xff]
    %v138 = vld [vmem:[%s1 + $0x3d8] sm:$0xff]
    %v139 = vld [vmem:[%s1 + $0x3e0] sm:$0xff]
    %v140 = vld [vmem:[%s1 + $0x3e8] sm:$0xff]
    %v141 = vld [vmem:[%s1 + $0x3f0] sm:$0xff]
    %v142 = vld [vmem:[%s1 + $0x3f8] sm:$0xff]
    %v143 = vld [vmem:[%s1 + $0x400] sm:$0xff]
    %v144 = vld [vmem:[%s1 + $0x408] sm:$0xff]
    %v145 = vld [vmem:[%s1 + $0x410] sm:$0xff]
    %v146 = vld [vmem:[%s1 + $0x418] sm:$0xff]
    %v147 = vld [vmem:[%s1 + $0x420] sm:$0xff]
    %v148 = vld [vmem:[%s1 + $0x428] sm:$0xff]
    %v149 = vld [vmem:[%s1 + $0x430] sm:$0xff]
    %v150 = vld [vmem:[%s1 + $0x438] sm:$0xff]
    %v151 = vld [vmem:[%s1 + $0x440] sm:$0xff]
    %v152 = vld [vmem:[%s1 + $0x448] sm:$0xff]
    %v153 = vld [vmem:[%s1 + $0x450] sm:$0xff]
    %v154 = vld [vmem:[%s1 + $0x458] sm:$0xff]
    %v155 = vld [vmem:[%s1 + $0x460] sm:$0xff]
    %v156 = vld [vmem:[%s1 + $0x468] sm:$0xff]
    %v157 = vld [vmem:[%s1 + $0x470] sm:$0xff]
    %v158 = vld [vmem:[%s1 + $0x478] sm:$0xff]
    %v159 = vld [vmem:[%s1 + $0x480] sm:$0xff]
    %v160 = vld [vmem:[%s1 + $0x488] sm:$0xff]
    %v161 = vld [vmem:[%s1 + $0x490] sm:$0xff]
    %v162 = vld [vmem:[%s1 + $0x498] sm:$0xff]
    %v163 = vld [vmem:[%s1 + $0x4a0] sm:$0xff]
    %v164 = vld [vmem:[%s1 + $0x4a8] sm:$0xff]
    %v165 = vld [vmem:[%s1 + $0x4b0] sm:$0xff]
    %v166 = vld [vmem:[%s1 + $0x4b8] sm:$0xff]
    %v167 = vld [vmem:[%s1 + $0x4c0] sm:$0xff]
    %v168 = vld [vmem:[%s1 + $0x4c8] sm:$0xff]
    %v169 = vld [vmem:[%s1 + $0x4d0] sm:$0xff]
    %v170 = vld [vmem:[%s1 + $0x4d8] sm:$0xff]
    %v171 = vld [vmem:[%s1 + $0x4e0] sm:$0xff]
    %v172 = vld [vmem:[%s1 + $0x4e8] sm:$0xff]
    %v173 = vld [vmem:[%s1 + $0x4f0] sm:$0xff]
    %v174 = vld [vmem:[%s1 + $0x4f8] sm:$0xff]
    %v175 = vld [vmem:[%s1 + $0x500] sm:$0xff]
    %v176 = vld [vmem:[%s1 + $0x508] sm:$0xff]
    %v177 = vld [vmem:[%s1 + $0x510] sm:$0xff]
    %v178 = vld [vmem:[%s1 + $0x518] sm:$0xff]
    %v179 = vld [vmem:[%s1 + $0x520] sm:$0xff]
    %v180 = vld [vmem:[%s1 + $0x528] sm:$0xff]
    %v181 = vld [vmem:[%s1 + $0x530] sm:$0xff]
    %v182 = vld [vmem:[%s1 + $0x538] sm:$0xff]
    %v183 = vld [vmem:[%s1 + $0x540] sm:$0xff]
    %v184 = vld [vmem:[%s1 + $0x548] sm:$0xff]
    %v185 = vld [vmem:[%s1 + $0x550] sm:$0xff]
    %v186 = vld [vmem:[%s1 + $0x558] sm:$0xff]
    %v187 = vld [vmem:[%s1 + $0x560] sm:$0xff]
    %v188 = vld [vmem:[%s1 + $0x568] sm:$0xff]
    %v189 = vld [vmem:[%s1 + $0x570] sm:$0xff]
    %v190 = vld [vmem:[%s1 + $0x578] sm:$0xff]
    %v191 = vld [vmem:[%s1 + $0x580] sm:$0xff]
    %v192 = vld [vmem:[%s1 + $0x588] sm:$0xff]
    %v193 = vld [vmem:[%s1 + $0x590] sm:$0xff]
    %v194 = vld [vmem:[%s1 + $0x598] sm:$0xff]
    %v195 = vld [vmem:[%s1 + $0x5a0] sm:$0xff]
    %v196 = vld [vmem:[%s1 + $0x5a8] sm:$0xff]
    %v197 = vld [vmem:[%s1 + $0x5b0] sm:$0xff]
    %v198 = vld [vmem:[%s1 + $0x5b8] sm:$0xff]
    %v199 = vld [vmem:[%s1 + $0x5c0] sm:$0xff]
    %v200 = vld [vmem:[%s1 + $0x5c8] sm:$0xff]
    %v201 = vld [vmem:[%s1 + $0x5d0] sm:$0xff]
    %v202 = vld [vmem:[%s1 + $0x5d8] sm:$0xff]
    %v203 = vld [vmem:[%s1 + $0x5e0] sm:$0xff]
    %v204 = vld [vmem:[%s1 + $0x5e8] sm:$0xff]
    %v205 = vld [vmem:[%s1 + $0x5f0] sm:$0xff]
    %v206 = vld [vmem:[%s1 + $0x5f8] sm:$0xff]
    %v207 = vld [vmem:[%s1 + $0x600] sm:$0xff]
    %v208 = vld [vmem:[%s1 + $0x608] sm:$0xff]
    %v209 = vld [vmem:[%s1 + $0x610] sm:$0xff]
    %v210 = vld [vmem:[%s1 + $0x618] sm:$0xff]
    %v211 = vld [vmem:[%s1 + $0x620] sm:$0xff]
    %v212 = vld [vmem:[%s1 + $0x628] sm:$0xff]
    %v213 = vld [vmem:[%s1 + $0x630] sm:$0xff]
    %v214 = vld [vmem:[%s1 + $0x638] sm:$0xff]
    %v215 = vld [vmem:[%s1 + $0x640] sm:$0xff]
    %v216 = vld [vmem:[%s1 + $0x648] sm:$0xff]
    %v217 = vld [vmem:[%s1 + $0x650] sm:$0xff]
    %v218 = vld [vmem:[%s1 + $0x658] sm:$0xff]
    %v219 = vld [vmem:[%s1 + $0x660] sm:$0xff]
    %v220 = vld [vmem:[%s1 + $0x668] sm:$0xff]
    %v221 = vld [vmem:[%s1 + $0x670] sm:$0xff]
    %v222 = vld [vmem:[%s1 + $0x678] sm:$0xff]
    %v223 = vld [vmem:[%s1 + $0x680] sm:$0xff]
    %v224 = vld [vmem:[%s1 + $0x688] sm:$0xff]
    %v225 = vld [vmem:[%s1 + $0x690] sm:$0xff]
    %v226 = vld [vmem:[%s1 + $0x698] sm:$0xff]
    %v227 = vld [vmem:[%s1 + $0x6a0] sm:$0xff]
    %v228 = vld [vmem:[%s1 + $0x6a8] sm:$0xff]
    %v229 = vld [vmem:[%s1 + $0x6b0] sm:$0xff]
    %v230 = vld [vmem:[%s1 + $0x6b8] sm:$0xff]
    %v231 = vld [vmem:[%s1 + $0x6c0] sm:$0xff]
    %v232 = vld [vmem:[%s1 + $0x6c8] sm:$0xff]
    %v233 = vld [vmem:[%s1 + $0x6d0] sm:$0xff]
    %v234 = vld [vmem:[%s1 + $0x6d8] sm:$0xff]
    %v235 = vld [vmem:[%s1 + $0x6e0] sm:$0xff]
    %v236 = vld [vmem:[%s1 + $0x6e8] sm:$0xff]
    %v237 = vld [vmem:[%s1 + $0x6f0] sm:$0xff]
    %v238 = vld [vmem:[%s1 + $0x6f8] sm:$0xff]
    %v239 = vld [vmem:[%s1 + $0x700] sm:$0xff]
    %v240 = vld [vmem:[%s1 + $0x708] sm:$0xff]
    %v241 = vld [vmem:[%s1 + $0x710] sm:$0xff]
    %v242 = vld [vmem:[%s1 + $0x718] sm:$0xff]
    %v243 = vld [vmem:[%s1 + $0x720] sm:$0xff]
    %v244 = vld [vmem:[%s1 + $0x728] sm:$0xff]
    %v245 = vld [vmem:[%s1 + $0x730] sm:$0xff]
    %v246 = vld [vmem:[%s1 + $0x738] sm:$0xff]
    %v247 = vld [vmem:[%s1 + $0x740] sm:$0xff]
    %v248 = vld [vmem:[%s1 + $0x748] sm:$0xff]
    %v249 = vld [vmem:[%s1 + $0x750] sm:$0xff]
    %v250 = vld [vmem:[%s1 + $0x758] sm:$0xff]
    %v251 = vld [vmem:[%s1 + $0x760] sm:$0xff]
    %v252 = vld [vmem:[%s1 + $0x768] sm:$0xff]
    %v253 = vld [vmem:[%s1 + $0x770] sm:$0xff]
    %v254 = vld [vmem:[%s1 + $0x778] sm:$0xff]
    %v255 = vld [vmem:[%s1 + $0x780] sm:$0xff]
    %v256 = vld [vmem:[%s1 + $0x788] sm:$0xff]
    %v257 = vld [vmem:[%s1 + $0x790] sm:$0xff]
    %v258 = vld [vmem:[%s1 + $0x798] sm:$0xff]
    %v259 = vld [vmem:[%s1 + $0x7a0] sm:$0xff]
    %v260 = vld [vmem:[%s1 + $0x7a8] sm:$0xff]
    %v261 = vld [vmem:[%s1 + $0x7b0] sm:$0xff]
    %v262 = vld [vmem:[%s1 + $0x7b8] sm:$0xff]
    %v263 = vld [vmem:[%s1 + $0x7c0] sm:$0xff]
    %v264 = vld [vmem:[%s1 + $0x7c8] sm:$0xff]
    %v265 = vld [vmem:[%s1 + $0x7d0] sm:$0xff]
    %v266 = vld [vmem:[%s1 + $0x7d8] sm:$0xff]
    %v267 = vld [vmem:[%s1 + $0x7e0] sm:$0xff]
    %v268 = vld [vmem:[%s1 + $0x7e8] sm:$0xff]
    %v269 = vld [vmem:[%s1 + $0x7f0] sm:$0xff]
    %v270 = vld [vmem:[%s1 + $0x7f8] sm:$0xff]
    %v271 = vld [vmem:[%s0] sm:$0xff]
    %v272 = vld [vmem:[%s0 + $0x8] sm:$0xff]
    %v273 = vld [vmem:[%s0 + $0x10] sm:$0xff]
    %v274 = vld [vmem:[%s0 + $0x18] sm:$0xff]
    %v275 = vld [vmem:[%s0 + $0x20] sm:$0xff]
    %v276 = vld [vmem:[%s0 + $0x28] sm:$0xff]
    %v277 = vld [vmem:[%s0 + $0x30] sm:$0xff]
    %v278 = vld [vmem:[%s0 + $0x38] sm:$0xff]
    %v279 = vld [vmem:[%s0 + $0x40] sm:$0xff]
    %v280 = vld [vmem:[%s0 + $0x48] sm:$0xff]
    %v281 = vld [vmem:[%s0 + $0x50] sm:$0xff]
    %v282 = vld [vmem:[%s0 + $0x58] sm:$0xff]
    %v283 = vld [vmem:[%s0 + $0x60] sm:$0xff]
    %v284 = vld [vmem:[%s0 + $0x68] sm:$0xff]
    %v285 = vld [vmem:[%s0 + $0x70] sm:$0xff]
    %v286 = vld [vmem:[%s0 + $0x78] sm:$0xff]
    %v287 = vld [vmem:[%s0 + $0x80] sm:$0xff]
    %v288 = vld [vmem:[%s0 + $0x88] sm:$0xff]
    %v289 = vld [vmem:[%s0 + $0x90] sm:$0xff]
    %v290 = vld [vmem:[%s0 + $0x98] sm:$0xff]
    %v291 = vld [vmem:[%s0 + $0xa0] sm:$0xff]
    %v292 = vld [vmem:[%s0 + $0xa8] sm:$0xff]
    %v293 = vld [vmem:[%s0 + $0xb0] sm:$0xff]
    %v294 = vld [vmem:[%s0 + $0xb8] sm:$0xff]
    %v295 = vld [vmem:[%s0 + $0xc0] sm:$0xff]
    %v296 = vld [vmem:[%s0 + $0xc8] sm:$0xff]
    %v297 = vld [vmem:[%s0 + $0xd0] sm:$0xff]
    %v298 = vld [vmem:[%s0 + $0xd8] sm:$0xff]
    %v299 = vld [vmem:[%s0 + $0xe0] sm:$0xff]
    %v300 = vld [vmem:[%s0 + $0xe8] sm:$0xff]
    %v301 = vld [vmem:[%s0 + $0xf0] sm:$0xff]
    %v302 = vld [vmem:[%s0 + $0xf8] sm:$0xff]
    %v335 = vunpack.c.l.b16 %v271
    %v336 = vunpack.c.h.b16 %v271
    %v337 = vunpack.c.l.b16 %v272
    %v338 = vunpack.c.h.b16 %v272
    %v339 = vunpack.c.l.b16 %v273
    %v340 = vunpack.c.h.b16 %v273
    %v341 = vunpack.c.l.b16 %v274
    %v342 = vunpack.c.h.b16 %v274
    %v343 = vunpack.c.l.b16 %v275
    %v344 = vunpack.c.h.b16 %v275
    %v345 = vunpack.c.l.b16 %v276
    %v346 = vunpack.c.h.b16 %v276
    %v347 = vunpack.c.l.b16 %v277
    %v348 = vunpack.c.h.b16 %v277
    %v349 = vunpack.c.l.b16 %v278
    %v350 = vunpack.c.h.b16 %v278
    %v351 = vunpack.c.l.b16 %v279
    %v352 = vunpack.c.h.b16 %v279
    %v353 = vunpack.c.l.b16 %v280
    %v354 = vunpack.c.h.b16 %v280
    %v355 = vunpack.c.l.b16 %v281
    %v356 = vunpack.c.h.b16 %v281
    %v357 = vunpack.c.l.b16 %v282
    %v358 = vunpack.c.h.b16 %v282
    %v359 = vunpack.c.l.b16 %v283
    %v360 = vunpack.c.h.b16 %v283
    %v361 = vunpack.c.l.b16 %v284
    %v362 = vunpack.c.h.b16 %v284
    %v363 = vunpack.c.l.b16 %v285
    %v364 = vunpack.c.h.b16 %v285
    %v365 = vunpack.c.l.b16 %v286
    %v366 = vunpack.c.h.b16 %v286
    %v367 = vunpack.c.l.b16 %v287
    %v368 = vunpack.c.h.b16 %v287
    %v369 = vunpack.c.l.b16 %v288
    %v370 = vunpack.c.h.b16 %v288
    %v371 = vunpack.c.l.b16 %v289
    %v372 = vunpack.c.h.b16 %v289
    %v373 = vunpack.c.l.b16 %v290
    %v374 = vunpack.c.h.b16 %v290
    %v375 = vunpack.c.l.b16 %v291
    %v376 = vunpack.c.h.b16 %v291
    %v377 = vunpack.c.l.b16 %v292
    %v378 = vunpack.c.h.b16 %v292
    %v379 = vunpack.c.l.b16 %v293
    %v380 = vunpack.c.h.b16 %v293
    %v381 = vunpack.c.l.b16 %v294
    %v382 = vunpack.c.h.b16 %v294
    %v383 = vunpack.c.l.b16 %v295
    %v384 = vunpack.c.h.b16 %v295
    %v385 = vunpack.c.l.b16 %v296
    %v386 = vunpack.c.h.b16 %v296
    %v387 = vunpack.c.l.b16 %v297
    %v388 = vunpack.c.h.b16 %v297
    %v389 = vunpack.c.l.b16 %v298
    %v390 = vunpack.c.h.b16 %v298
    %v391 = vunpack.c.l.b16 %v299
    %v392 = vunpack.c.h.b16 %v299
    %v393 = vunpack.c.l.b16 %v300
    %v394 = vunpack.c.h.b16 %v300
    %v395 = vunpack.c.l.b16 %v301
    %v396 = vunpack.c.h.b16 %v301
    %v397 = vunpack.c.l.b16 %v302
    %v398 = vunpack.c.h.b16 %v302
    %v399 = vpack.c.b16 %v351, %v335
    %v400 = vpack.c.b16 %v352, %v336
    %v401 = vpack.c.b16 %v353, %v337
    %v402 = vpack.c.b16 %v354, %v338
    %v403 = vpack.c.b16 %v355, %v339
    %v404 = vpack.c.b16 %v356, %v340
    %v405 = vpack.c.b16 %v357, %v341
    %v406 = vpack.c.b16 %v358, %v342
    %v407 = vpack.c.b16 %v359, %v343
    %v408 = vpack.c.b16 %v360, %v344
    %v409 = vpack.c.b16 %v361, %v345
    %v410 = vpack.c.b16 %v362, %v346
    %v411 = vpack.c.b16 %v363, %v347
    %v412 = vpack.c.b16 %v364, %v348
    %v413 = vpack.c.b16 %v365, %v349
    %v414 = vpack.c.b16 %v366, %v350
    %v415 = vpack.c.b16 %v383, %v367
    %v416 = vpack.c.b16 %v384, %v368
    %v417 = vpack.c.b16 %v385, %v369
    %v418 = vpack.c.b16 %v386, %v370
    %v419 = vpack.c.b16 %v387, %v371
    %v420 = vpack.c.b16 %v388, %v372
    %v421 = vpack.c.b16 %v389, %v373
    %v422 = vpack.c.b16 %v390, %v374
    %v423 = vpack.c.b16 %v391, %v375
    %v424 = vpack.c.b16 %v392, %v376
    %v425 = vpack.c.b16 %v393, %v377
    %v426 = vpack.c.b16 %v394, %v378
    %v427 = vpack.c.b16 %v395, %v379
    %v428 = vpack.c.b16 %v396, %v380
    %v429 = vpack.c.b16 %v397, %v381
    %v430 = vpack.c.b16 %v398, %v382
    %v719 = vunpack.c.l.b16 %v15
    %v720 = vunpack.c.h.b16 %v15
    %v721 = vunpack.c.l.b16 %v16
    %v722 = vunpack.c.h.b16 %v16
    %v723 = vunpack.c.l.b16 %v17
    %v724 = vunpack.c.h.b16 %v17
    %v725 = vunpack.c.l.b16 %v18
    %v726 = vunpack.c.h.b16 %v18
    %v727 = vunpack.c.l.b16 %v19
    %v728 = vunpack.c.h.b16 %v19
    %v729 = vunpack.c.l.b16 %v20
    %v730 = vunpack.c.h.b16 %v20
    %v731 = vunpack.c.l.b16 %v21
    %v732 = vunpack.c.h.b16 %v21
    %v733 = vunpack.c.l.b16 %v22
    %v734 = vunpack.c.h.b16 %v22
    %v735 = vunpack.c.l.b16 %v23
    %v736 = vunpack.c.h.b16 %v23
    %v737 = vunpack.c.l.b16 %v24
    %v738 = vunpack.c.h.b16 %v24
    %v739 = vunpack.c.l.b16 %v25
    %v740 = vunpack.c.h.b16 %v25
    %v741 = vunpack.c.l.b16 %v26
    %v742 = vunpack.c.h.b16 %v26
    %v743 = vunpack.c.l.b16 %v27
    %v744 = vunpack.c.h.b16 %v27
    %v745 = vunpack.c.l.b16 %v28
    %v746 = vunpack.c.h.b16 %v28
    %v747 = vunpack.c.l.b16 %v29
    %v748 = vunpack.c.h.b16 %v29
    %v749 = vunpack.c.l.b16 %v30
    %v750 = vunpack.c.h.b16 %v30
    %v751 = vunpack.c.l.b16 %v31
    %v752 = vunpack.c.h.b16 %v31
    %v753 = vunpack.c.l.b16 %v32
    %v754 = vunpack.c.h.b16 %v32
    %v755 = vunpack.c.l.b16 %v33
    %v756 = vunpack.c.h.b16 %v33
    %v757 = vunpack.c.l.b16 %v34
    %v758 = vunpack.c.h.b16 %v34
    %v759 = vunpack.c.l.b16 %v35
    %v760 = vunpack.c.h.b16 %v35
    %v761 = vunpack.c.l.b16 %v36
    %v762 = vunpack.c.h.b16 %v36
    %v763 = vunpack.c.l.b16 %v37
    %v764 = vunpack.c.h.b16 %v37
    %v765 = vunpack.c.l.b16 %v38
    %v766 = vunpack.c.h.b16 %v38
    %v767 = vunpack.c.l.b16 %v39
    %v768 = vunpack.c.h.b16 %v39
    %v769 = vunpack.c.l.b16 %v40
    %v770 = vunpack.c.h.b16 %v40
    %v771 = vunpack.c.l.b16 %v41
    %v772 = vunpack.c.h.b16 %v41
    %v773 = vunpack.c.l.b16 %v42
    %v774 = vunpack.c.h.b16 %v42
    %v775 = vunpack.c.l.b16 %v43
    %v776 = vunpack.c.h.b16 %v43
    %v777 = vunpack.c.l.b16 %v44
    %v778 = vunpack.c.h.b16 %v44
    %v779 = vunpack.c.l.b16 %v45
    %v780 = vunpack.c.h.b16 %v45
    %v781 = vunpack.c.l.b16 %v46
    %v782 = vunpack.c.h.b16 %v46
    %v783 = vunpack.c.l.b16 %v47
    %v784 = vunpack.c.h.b16 %v47
    %v785 = vunpack.c.l.b16 %v48
    %v786 = vunpack.c.h.b16 %v48
    %v787 = vunpack.c.l.b16 %v49
    %v788 = vunpack.c.h.b16 %v49
    %v789 = vunpack.c.l.b16 %v50
    %v790 = vunpack.c.h.b16 %v50
    %v791 = vunpack.c.l.b16 %v51
    %v792 = vunpack.c.h.b16 %v51
    %v793 = vunpack.c.l.b16 %v52
    %v794 = vunpack.c.h.b16 %v52
    %v795 = vunpack.c.l.b16 %v53
    %v796 = vunpack.c.h.b16 %v53
    %v797 = vunpack.c.l.b16 %v54
    %v798 = vunpack.c.h.b16 %v54
    %v799 = vunpack.c.l.b16 %v55
    %v800 = vunpack.c.h.b16 %v55
    %v801 = vunpack.c.l.b16 %v56
    %v802 = vunpack.c.h.b16 %v56
    %v803 = vunpack.c.l.b16 %v57
    %v804 = vunpack.c.h.b16 %v57
    %v805 = vunpack.c.l.b16 %v58
    %v806 = vunpack.c.h.b16 %v58
    %v807 = vunpack.c.l.b16 %v59
    %v808 = vunpack.c.h.b16 %v59
    %v809 = vunpack.c.l.b16 %v60
    %v810 = vunpack.c.h.b16 %v60
    %v811 = vunpack.c.l.b16 %v61
    %v812 = vunpack.c.h.b16 %v61
    %v813 = vunpack.c.l.b16 %v62
    %v814 = vunpack.c.h.b16 %v62
    %v815 = vunpack.c.l.b16 %v63
    %v816 = vunpack.c.h.b16 %v63
    %v817 = vunpack.c.l.b16 %v64
    %v818 = vunpack.c.h.b16 %v64
    %v819 = vunpack.c.l.b16 %v65
    %v820 = vunpack.c.h.b16 %v65
    %v821 = vunpack.c.l.b16 %v66
    %v822 = vunpack.c.h.b16 %v66
    %v823 = vunpack.c.l.b16 %v67
    %v824 = vunpack.c.h.b16 %v67
    %v825 = vunpack.c.l.b16 %v68
    %v826 = vunpack.c.h.b16 %v68
    %v827 = vunpack.c.l.b16 %v69
    %v828 = vunpack.c.h.b16 %v69
    %v829 = vunpack.c.l.b16 %v70
    %v830 = vunpack.c.h.b16 %v70
    %v831 = vunpack.c.l.b16 %v71
    %v832 = vunpack.c.h.b16 %v71
    %v833 = vunpack.c.l.b16 %v72
    %v834 = vunpack.c.h.b16 %v72
    %v835 = vunpack.c.l.b16 %v73
    %v836 = vunpack.c.h.b16 %v73
    %v837 = vunpack.c.l.b16 %v74
    %v838 = vunpack.c.h.b16 %v74
    %v839 = vunpack.c.l.b16 %v75
    %v840 = vunpack.c.h.b16 %v75
    %v841 = vunpack.c.l.b16 %v76
    %v842 = vunpack.c.h.b16 %v76
    %v843 = vunpack.c.l.b16 %v77
    %v844 = vunpack.c.h.b16 %v77
    %v845 = vunpack.c.l.b16 %v78
    %v846 = vunpack.c.h.b16 %v78
    %v847 = vunpack.c.l.b16 %v79
    %v848 = vunpack.c.h.b16 %v79
    %v849 = vunpack.c.l.b16 %v80
    %v850 = vunpack.c.h.b16 %v80
    %v851 = vunpack.c.l.b16 %v81
    %v852 = vunpack.c.h.b16 %v81
    %v853 = vunpack.c.l.b16 %v82
    %v854 = vunpack.c.h.b16 %v82
    %v855 = vunpack.c.l.b16 %v83
    %v856 = vunpack.c.h.b16 %v83
    %v857 = vunpack.c.l.b16 %v84
    %v858 = vunpack.c.h.b16 %v84
    %v859 = vunpack.c.l.b16 %v85
    %v860 = vunpack.c.h.b16 %v85
    %v861 = vunpack.c.l.b16 %v86
    %v862 = vunpack.c.h.b16 %v86
    %v863 = vunpack.c.l.b16 %v87
    %v864 = vunpack.c.h.b16 %v87
    %v865 = vunpack.c.l.b16 %v88
    %v866 = vunpack.c.h.b16 %v88
    %v867 = vunpack.c.l.b16 %v89
    %v868 = vunpack.c.h.b16 %v89
    %v869 = vunpack.c.l.b16 %v90
    %v870 = vunpack.c.h.b16 %v90
    %v871 = vunpack.c.l.b16 %v91
    %v872 = vunpack.c.h.b16 %v91
    %v873 = vunpack.c.l.b16 %v92
    %v874 = vunpack.c.h.b16 %v92
    %v875 = vunpack.c.l.b16 %v93
    %v876 = vunpack.c.h.b16 %v93
    %v877 = vunpack.c.l.b16 %v94
    %v878 = vunpack.c.h.b16 %v94
    %v879 = vunpack.c.l.b16 %v95
    %v880 = vunpack.c.h.b16 %v95
    %v881 = vunpack.c.l.b16 %v96
    %v882 = vunpack.c.h.b16 %v96
    %v883 = vunpack.c.l.b16 %v97
    %v884 = vunpack.c.h.b16 %v97
    %v885 = vunpack.c.l.b16 %v98
    %v886 = vunpack.c.h.b16 %v98
    %v887 = vunpack.c.l.b16 %v99
    %v888 = vunpack.c.h.b16 %v99
    %v889 = vunpack.c.l.b16 %v100
    %v890 = vunpack.c.h.b16 %v100
    %v891 = vunpack.c.l.b16 %v101
    %v892 = vunpack.c.h.b16 %v101
    %v893 = vunpack.c.l.b16 %v102
    %v894 = vunpack.c.h.b16 %v102
    %v895 = vunpack.c.l.b16 %v103
    %v896 = vunpack.c.h.b16 %v103
    %v897 = vunpack.c.l.b16 %v104
    %v898 = vunpack.c.h.b16 %v104
    %v899 = vunpack.c.l.b16 %v105
    %v900 = vunpack.c.h.b16 %v105
    %v901 = vunpack.c.l.b16 %v106
    %v902 = vunpack.c.h.b16 %v106
    %v903 = vunpack.c.l.b16 %v107
    %v904 = vunpack.c.h.b16 %v107
    %v905 = vunpack.c.l.b16 %v108
    %v906 = vunpack.c.h.b16 %v108
    %v907 = vunpack.c.l.b16 %v109
    %v908 = vunpack.c.h.b16 %v109
    %v909 = vunpack.c.l.b16 %v110
    %v910 = vunpack.c.h.b16 %v110
    %v911 = vunpack.c.l.b16 %v111
    %v912 = vunpack.c.h.b16 %v111
    %v913 = vunpack.c.l.b16 %v112
    %v914 = vunpack.c.h.b16 %v112
    %v915 = vunpack.c.l.b16 %v113
    %v916 = vunpack.c.h.b16 %v113
    %v917 = vunpack.c.l.b16 %v114
    %v918 = vunpack.c.h.b16 %v114
    %v919 = vunpack.c.l.b16 %v115
    %v920 = vunpack.c.h.b16 %v115
    %v921 = vunpack.c.l.b16 %v116
    %v922 = vunpack.c.h.b16 %v116
    %v923 = vunpack.c.l.b16 %v117
    %v924 = vunpack.c.h.b16 %v117
    %v925 = vunpack.c.l.b16 %v118
    %v926 = vunpack.c.h.b16 %v118
    %v927 = vunpack.c.l.b16 %v119
    %v928 = vunpack.c.h.b16 %v119
    %v929 = vunpack.c.l.b16 %v120
    %v930 = vunpack.c.h.b16 %v120
    %v931 = vunpack.c.l.b16 %v121
    %v932 = vunpack.c.h.b16 %v121
    %v933 = vunpack.c.l.b16 %v122
    %v934 = vunpack.c.h.b16 %v122
    %v935 = vunpack.c.l.b16 %v123
    %v936 = vunpack.c.h.b16 %v123
    %v937 = vunpack.c.l.b16 %v124
    %v938 = vunpack.c.h.b16 %v124
    %v939 = vunpack.c.l.b16 %v125
    %v940 = vunpack.c.h.b16 %v125
    %v941 = vunpack.c.l.b16 %v126
    %v942 = vunpack.c.h.b16 %v126
    %v943 = vunpack.c.l.b16 %v127
    %v944 = vunpack.c.h.b16 %v127
    %v945 = vunpack.c.l.b16 %v128
    %v946 = vunpack.c.h.b16 %v128
    %v947 = vunpack.c.l.b16 %v129
    %v948 = vunpack.c.h.b16 %v129
    %v949 = vunpack.c.l.b16 %v130
    %v950 = vunpack.c.h.b16 %v130
    %v951 = vunpack.c.l.b16 %v131
    %v952 = vunpack.c.h.b16 %v131
    %v953 = vunpack.c.l.b16 %v132
    %v954 = vunpack.c.h.b16 %v132
    %v955 = vunpack.c.l.b16 %v133
    %v956 = vunpack.c.h.b16 %v133
    %v957 = vunpack.c.l.b16 %v134
    %v958 = vunpack.c.h.b16 %v134
    %v959 = vunpack.c.l.b16 %v135
    %v960 = vunpack.c.h.b16 %v135
    %v961 = vunpack.c.l.b16 %v136
    %v962 = vunpack.c.h.b16 %v136
    %v963 = vunpack.c.l.b16 %v137
    %v964 = vunpack.c.h.b16 %v137
    %v965 = vunpack.c.l.b16 %v138
    %v966 = vunpack.c.h.b16 %v138
    %v967 = vunpack.c.l.b16 %v139
    %v968 = vunpack.c.h.b16 %v139
    %v969 = vunpack.c.l.b16 %v140
    %v970 = vunpack.c.h.b16 %v140
    %v971 = vunpack.c.l.b16 %v141
    %v972 = vunpack.c.h.b16 %v141
    %v973 = vunpack.c.l.b16 %v142
    %v974 = vunpack.c.h.b16 %v142
    %v975 = vunpack.c.l.b16 %v143
    %v976 = vunpack.c.h.b16 %v143
    %v977 = vunpack.c.l.b16 %v144
    %v978 = vunpack.c.h.b16 %v144
    %v979 = vunpack.c.l.b16 %v145
    %v980 = vunpack.c.h.b16 %v145
    %v981 = vunpack.c.l.b16 %v146
    %v982 = vunpack.c.h.b16 %v146
    %v983 = vunpack.c.l.b16 %v147
    %v984 = vunpack.c.h.b16 %v147
    %v985 = vunpack.c.l.b16 %v148
    %v986 = vunpack.c.h.b16 %v148
    %v987 = vunpack.c.l.b16 %v149
    %v988 = vunpack.c.h.b16 %v149
    %v989 = vunpack.c.l.b16 %v150
    %v990 = vunpack.c.h.b16 %v150
    %v991 = vunpack.c.l.b16 %v151
    %v992 = vunpack.c.h.b16 %v151
    %v993 = vunpack.c.l.b16 %v152
    %v994 = vunpack.c.h.b16 %v152
    %v995 = vunpack.c.l.b16 %v153
    %v996 = vunpack.c.h.b16 %v153
    %v997 = vunpack.c.l.b16 %v154
    %v998 = vunpack.c.h.b16 %v154
    %v999 = vunpack.c.l.b16 %v155
    %v1000 = vunpack.c.h.b16 %v155
    %v1001 = vunpack.c.l.b16 %v156
    %v1002 = vunpack.c.h.b16 %v156
    %v1003 = vunpack.c.l.b16 %v157
    %v1004 = vunpack.c.h.b16 %v157
    %v1005 = vunpack.c.l.b16 %v158
    %v1006 = vunpack.c.h.b16 %v158
    %v1007 = vunpack.c.l.b16 %v159
    %v1008 = vunpack.c.h.b16 %v159
    %v1009 = vunpack.c.l.b16 %v160
    %v1010 = vunpack.c.h.b16 %v160
    %v1011 = vunpack.c.l.b16 %v161
    %v1012 = vunpack.c.h.b16 %v161
    %v1013 = vunpack.c.l.b16 %v162
    %v1014 = vunpack.c.h.b16 %v162
    %v1015 = vunpack.c.l.b16 %v163
    %v1016 = vunpack.c.h.b16 %v163
    %v1017 = vunpack.c.l.b16 %v164
    %v1018 = vunpack.c.h.b16 %v164
    %v1019 = vunpack.c.l.b16 %v165
    %v1020 = vunpack.c.h.b16 %v165
    %v1021 = vunpack.c.l.b16 %v166
    %v1022 = vunpack.c.h.b16 %v166
    %v1023 = vunpack.c.l.b16 %v167
    %v1024 = vunpack.c.h.b16 %v167
    %v1025 = vunpack.c.l.b16 %v168
    %v1026 = vunpack.c.h.b16 %v168
    %v1027 = vunpack.c.l.b16 %v169
    %v1028 = vunpack.c.h.b16 %v169
    %v1029 = vunpack.c.l.b16 %v170
    %v1030 = vunpack.c.h.b16 %v170
    %v1031 = vunpack.c.l.b16 %v171
    %v1032 = vunpack.c.h.b16 %v171
    %v1033 = vunpack.c.l.b16 %v172
    %v1034 = vunpack.c.h.b16 %v172
    %v1035 = vunpack.c.l.b16 %v173
    %v1036 = vunpack.c.h.b16 %v173
    %v1037 = vunpack.c.l.b16 %v174
    %v1038 = vunpack.c.h.b16 %v174
    %v1039 = vunpack.c.l.b16 %v175
    %v1040 = vunpack.c.h.b16 %v175
    %v1041 = vunpack.c.l.b16 %v176
    %v1042 = vunpack.c.h.b16 %v176
    %v1043 = vunpack.c.l.b16 %v177
    %v1044 = vunpack.c.h.b16 %v177
    %v1045 = vunpack.c.l.b16 %v178
    %v1046 = vunpack.c.h.b16 %v178
    %v1047 = vunpack.c.l.b16 %v179
    %v1048 = vunpack.c.h.b16 %v179
    %v1049 = vunpack.c.l.b16 %v180
    %v1050 = vunpack.c.h.b16 %v180
    %v1051 = vunpack.c.l.b16 %v181
    %v1052 = vunpack.c.h.b16 %v181
    %v1053 = vunpack.c.l.b16 %v182
    %v1054 = vunpack.c.h.b16 %v182
    %v1055 = vunpack.c.l.b16 %v183
    %v1056 = vunpack.c.h.b16 %v183
    %v1057 = vunpack.c.l.b16 %v184
    %v1058 = vunpack.c.h.b16 %v184
    %v1059 = vunpack.c.l.b16 %v185
    %v1060 = vunpack.c.h.b16 %v185
    %v1061 = vunpack.c.l.b16 %v186
    %v1062 = vunpack.c.h.b16 %v186
    %v1063 = vunpack.c.l.b16 %v187
    %v1064 = vunpack.c.h.b16 %v187
    %v1065 = vunpack.c.l.b16 %v188
    %v1066 = vunpack.c.h.b16 %v188
    %v1067 = vunpack.c.l.b16 %v189
    %v1068 = vunpack.c.h.b16 %v189
    %v1069 = vunpack.c.l.b16 %v190
    %v1070 = vunpack.c.h.b16 %v190
    %v1071 = vunpack.c.l.b16 %v191
    %v1072 = vunpack.c.h.b16 %v191
    %v1073 = vunpack.c.l.b16 %v192
    %v1074 = vunpack.c.h.b16 %v192
    %v1075 = vunpack.c.l.b16 %v193
    %v1076 = vunpack.c.h.b16 %v193
    %v1077 = vunpack.c.l.b16 %v194
    %v1078 = vunpack.c.h.b16 %v194
    %v1079 = vunpack.c.l.b16 %v195
    %v1080 = vunpack.c.h.b16 %v195
    %v1081 = vunpack.c.l.b16 %v196
    %v1082 = vunpack.c.h.b16 %v196
    %v1083 = vunpack.c.l.b16 %v197
    %v1084 = vunpack.c.h.b16 %v197
    %v1085 = vunpack.c.l.b16 %v198
    %v1086 = vunpack.c.h.b16 %v198
    %v1087 = vunpack.c.l.b16 %v199
    %v1088 = vunpack.c.h.b16 %v199
    %v1089 = vunpack.c.l.b16 %v200
    %v1090 = vunpack.c.h.b16 %v200
    %v1091 = vunpack.c.l.b16 %v201
    %v1092 = vunpack.c.h.b16 %v201
    %v1093 = vunpack.c.l.b16 %v202
    %v1094 = vunpack.c.h.b16 %v202
    %v1095 = vunpack.c.l.b16 %v203
    %v1096 = vunpack.c.h.b16 %v203
    %v1097 = vunpack.c.l.b16 %v204
    %v1098 = vunpack.c.h.b16 %v204
    %v1099 = vunpack.c.l.b16 %v205
    %v1100 = vunpack.c.h.b16 %v205
    %v1101 = vunpack.c.l.b16 %v206
    %v1102 = vunpack.c.h.b16 %v206
    %v1103 = vunpack.c.l.b16 %v207
    %v1104 = vunpack.c.h.b16 %v207
    %v1105 = vunpack.c.l.b16 %v208
    %v1106 = vunpack.c.h.b16 %v208
    %v1107 = vunpack.c.l.b16 %v209
    %v1108 = vunpack.c.h.b16 %v209
    %v1109 = vunpack.c.l.b16 %v210
    %v1110 = vunpack.c.h.b16 %v210
    %v1111 = vunpack.c.l.b16 %v211
    %v1112 = vunpack.c.h.b16 %v211
    %v1113 = vunpack.c.l.b16 %v212
    %v1114 = vunpack.c.h.b16 %v212
    %v1115 = vunpack.c.l.b16 %v213
    %v1116 = vunpack.c.h.b16 %v213
    %v1117 = vunpack.c.l.b16 %v214
    %v1118 = vunpack.c.h.b16 %v214
    %v1119 = vunpack.c.l.b16 %v215
    %v1120 = vunpack.c.h.b16 %v215
    %v1121 = vunpack.c.l.b16 %v216
    %v1122 = vunpack.c.h.b16 %v216
    %v1123 = vunpack.c.l.b16 %v217
    %v1124 = vunpack.c.h.b16 %v217
    %v1125 = vunpack.c.l.b16 %v218
    %v1126 = vunpack.c.h.b16 %v218
    %v1127 = vunpack.c.l.b16 %v219
    %v1128 = vunpack.c.h.b16 %v219
    %v1129 = vunpack.c.l.b16 %v220
    %v1130 = vunpack.c.h.b16 %v220
    %v1131 = vunpack.c.l.b16 %v221
    %v1132 = vunpack.c.h.b16 %v221
    %v1133 = vunpack.c.l.b16 %v222
    %v1134 = vunpack.c.h.b16 %v222
    %v1135 = vunpack.c.l.b16 %v223
    %v1136 = vunpack.c.h.b16 %v223
    %v1137 = vunpack.c.l.b16 %v224
    %v1138 = vunpack.c.h.b16 %v224
    %v1139 = vunpack.c.l.b16 %v225
    %v1140 = vunpack.c.h.b16 %v225
    %v1141 = vunpack.c.l.b16 %v226
    %v1142 = vunpack.c.h.b16 %v226
    %v1143 = vunpack.c.l.b16 %v227
    %v1144 = vunpack.c.h.b16 %v227
    %v1145 = vunpack.c.l.b16 %v228
    %v1146 = vunpack.c.h.b16 %v228
    %v1147 = vunpack.c.l.b16 %v229
    %v1148 = vunpack.c.h.b16 %v229
    %v1149 = vunpack.c.l.b16 %v230
    %v1150 = vunpack.c.h.b16 %v230
    %v1151 = vunpack.c.l.b16 %v231
    %v1152 = vunpack.c.h.b16 %v231
    %v1153 = vunpack.c.l.b16 %v232
    %v1154 = vunpack.c.h.b16 %v232
    %v1155 = vunpack.c.l.b16 %v233
    %v1156 = vunpack.c.h.b16 %v233
    %v1157 = vunpack.c.l.b16 %v234
    %v1158 = vunpack.c.h.b16 %v234
    %v1159 = vunpack.c.l.b16 %v235
    %v1160 = vunpack.c.h.b16 %v235
    %v1161 = vunpack.c.l.b16 %v236
    %v1162 = vunpack.c.h.b16 %v236
    %v1163 = vunpack.c.l.b16 %v237
    %v1164 = vunpack.c.h.b16 %v237
    %v1165 = vunpack.c.l.b16 %v238
    %v1166 = vunpack.c.h.b16 %v238
    %v1167 = vunpack.c.l.b16 %v239
    %v1168 = vunpack.c.h.b16 %v239
    %v1169 = vunpack.c.l.b16 %v240
    %v1170 = vunpack.c.h.b16 %v240
    %v1171 = vunpack.c.l.b16 %v241
    %v1172 = vunpack.c.h.b16 %v241
    %v1173 = vunpack.c.l.b16 %v242
    %v1174 = vunpack.c.h.b16 %v242
    %v1175 = vunpack.c.l.b16 %v243
    %v1176 = vunpack.c.h.b16 %v243
    %v1177 = vunpack.c.l.b16 %v244
    %v1178 = vunpack.c.h.b16 %v244
    %v1179 = vunpack.c.l.b16 %v245
    %v1180 = vunpack.c.h.b16 %v245
    %v1181 = vunpack.c.l.b16 %v246
    %v1182 = vunpack.c.h.b16 %v246
    %v1183 = vunpack.c.l.b16 %v247
    %v1184 = vunpack.c.h.b16 %v247
    %v1185 = vunpack.c.l.b16 %v248
    %v1186 = vunpack.c.h.b16 %v248
    %v1187 = vunpack.c.l.b16 %v249
    %v1188 = vunpack.c.h.b16 %v249
    %v1189 = vunpack.c.l.b16 %v250
    %v1190 = vunpack.c.h.b16 %v250
    %v1191 = vunpack.c.l.b16 %v251
    %v1192 = vunpack.c.h.b16 %v251
    %v1193 = vunpack.c.l.b16 %v252
    %v1194 = vunpack.c.h.b16 %v252
    %v1195 = vunpack.c.l.b16 %v253
    %v1196 = vunpack.c.h.b16 %v253
    %v1197 = vunpack.c.l.b16 %v254
    %v1198 = vunpack.c.h.b16 %v254
    %v1199 = vunpack.c.l.b16 %v255
    %v1200 = vunpack.c.h.b16 %v255
    %v1201 = vunpack.c.l.b16 %v256
    %v1202 = vunpack.c.h.b16 %v256
    %v1203 = vunpack.c.l.b16 %v257
    %v1204 = vunpack.c.h.b16 %v257
    %v1205 = vunpack.c.l.b16 %v258
    %v1206 = vunpack.c.h.b16 %v258
    %v1207 = vunpack.c.l.b16 %v259
    %v1208 = vunpack.c.h.b16 %v259
    %v1209 = vunpack.c.l.b16 %v260
    %v1210 = vunpack.c.h.b16 %v260
    %v1211 = vunpack.c.l.b16 %v261
    %v1212 = vunpack.c.h.b16 %v261
    %v1213 = vunpack.c.l.b16 %v262
    %v1214 = vunpack.c.h.b16 %v262
    %v1215 = vunpack.c.l.b16 %v263
    %v1216 = vunpack.c.h.b16 %v263
    %v1217 = vunpack.c.l.b16 %v264
    %v1218 = vunpack.c.h.b16 %v264
    %v1219 = vunpack.c.l.b16 %v265
    %v1220 = vunpack.c.h.b16 %v265
    %v1221 = vunpack.c.l.b16 %v266
    %v1222 = vunpack.c.h.b16 %v266
    %v1223 = vunpack.c.l.b16 %v267
    %v1224 = vunpack.c.h.b16 %v267
    %v1225 = vunpack.c.l.b16 %v268
    %v1226 = vunpack.c.h.b16 %v268
    %v1227 = vunpack.c.l.b16 %v269
    %v1228 = vunpack.c.h.b16 %v269
    %v1229 = vunpack.c.l.b16 %v270
    %v1230 = vunpack.c.h.b16 %v270
    %v1231 = vpack.c.b16 %v721, %v719
    %v1232 = vpack.c.b16 %v722, %v720
    %v1233 = vpack.c.b16 %v725, %v723
    %v1234 = vpack.c.b16 %v726, %v724
    %v1235 = vpack.c.b16 %v729, %v727
    %v1236 = vpack.c.b16 %v730, %v728
    %v1237 = vpack.c.b16 %v733, %v731
    %v1238 = vpack.c.b16 %v734, %v732
    %v1239 = vpack.c.b16 %v737, %v735
    %v1240 = vpack.c.b16 %v738, %v736
    %v1241 = vpack.c.b16 %v741, %v739
    %v1242 = vpack.c.b16 %v742, %v740
    %v1243 = vpack.c.b16 %v745, %v743
    %v1244 = vpack.c.b16 %v746, %v744
    %v1245 = vpack.c.b16 %v749, %v747
    %v1246 = vpack.c.b16 %v750, %v748
    %v1247 = vpack.c.b16 %v753, %v751
    %v1248 = vpack.c.b16 %v754, %v752
    %v1249 = vpack.c.b16 %v757, %v755
    %v1250 = vpack.c.b16 %v758, %v756
    %v1251 = vpack.c.b16 %v761, %v759
    %v1252 = vpack.c.b16 %v762, %v760
    %v1253 = vpack.c.b16 %v765, %v763
    %v1254 = vpack.c.b16 %v766, %v764
    %v1255 = vpack.c.b16 %v769, %v767
    %v1256 = vpack.c.b16 %v770, %v768
    %v1257 = vpack.c.b16 %v773, %v771
    %v1258 = vpack.c.b16 %v774, %v772
    %v1259 = vpack.c.b16 %v777, %v775
    %v1260 = vpack.c.b16 %v778, %v776
    %v1261 = vpack.c.b16 %v781, %v779
    %v1262 = vpack.c.b16 %v782, %v780
    %v1263 = vpack.c.b16 %v785, %v783
    %v1264 = vpack.c.b16 %v786, %v784
    %v1265 = vpack.c.b16 %v789, %v787
    %v1266 = vpack.c.b16 %v790, %v788
    %v1267 = vpack.c.b16 %v793, %v791
    %v1268 = vpack.c.b16 %v794, %v792
    %v1269 = vpack.c.b16 %v797, %v795
    %v1270 = vpack.c.b16 %v798, %v796
    %v1271 = vpack.c.b16 %v801, %v799
    %v1272 = vpack.c.b16 %v802, %v800
    %v1273 = vpack.c.b16 %v805, %v803
    %v1274 = vpack.c.b16 %v806, %v804
    %v1275 = vpack.c.b16 %v809, %v807
    %v1276 = vpack.c.b16 %v810, %v808
    %v1277 = vpack.c.b16 %v813, %v811
    %v1278 = vpack.c.b16 %v814, %v812
    %v1279 = vpack.c.b16 %v817, %v815
    %v1280 = vpack.c.b16 %v818, %v816
    %v1281 = vpack.c.b16 %v821, %v819
    %v1282 = vpack.c.b16 %v822, %v820
    %v1283 = vpack.c.b16 %v825, %v823
    %v1284 = vpack.c.b16 %v826, %v824
    %v1285 = vpack.c.b16 %v829, %v827
    %v1286 = vpack.c.b16 %v830, %v828
    %v1287 = vpack.c.b16 %v833, %v831
    %v1288 = vpack.c.b16 %v834, %v832
    %v1289 = vpack.c.b16 %v837, %v835
    %v1290 = vpack.c.b16 %v838, %v836
    %v1291 = vpack.c.b16 %v841, %v839
    %v1292 = vpack.c.b16 %v842, %v840
    %v1293 = vpack.c.b16 %v845, %v843
    %v1294 = vpack.c.b16 %v846, %v844
    %v1295 = vpack.c.b16 %v849, %v847
    %v1296 = vpack.c.b16 %v850, %v848
    %v1297 = vpack.c.b16 %v853, %v851
    %v1298 = vpack.c.b16 %v854, %v852
    %v1299 = vpack.c.b16 %v857, %v855
    %v1300 = vpack.c.b16 %v858, %v856
    %v1301 = vpack.c.b16 %v861, %v859
    %v1302 = vpack.c.b16 %v862, %v860
    %v1303 = vpack.c.b16 %v865, %v863
    %v1304 = vpack.c.b16 %v866, %v864
    %v1305 = vpack.c.b16 %v869, %v867
    %v1306 = vpack.c.b16 %v870, %v868
    %v1307 = vpack.c.b16 %v873, %v871
    %v1308 = vpack.c.b16 %v874, %v872
    %v1309 = vpack.c.b16 %v877, %v875
    %v1310 = vpack.c.b16 %v878, %v876
    %v1311 = vpack.c.b16 %v881, %v879
    %v1312 = vpack.c.b16 %v882, %v880
    %v1313 = vpack.c.b16 %v885, %v883
    %v1314 = vpack.c.b16 %v886, %v884
    %v1315 = vpack.c.b16 %v889, %v887
    %v1316 = vpack.c.b16 %v890, %v888
    %v1317 = vpack.c.b16 %v893, %v891
    %v1318 = vpack.c.b16 %v894, %v892
    %v1319 = vpack.c.b16 %v897, %v895
    %v1320 = vpack.c.b16 %v898, %v896
    %v1321 = vpack.c.b16 %v901, %v899
    %v1322 = vpack.c.b16 %v902, %v900
    %v1323 = vpack.c.b16 %v905, %v903
    %v1324 = vpack.c.b16 %v906, %v904
    %v1325 = vpack.c.b16 %v909, %v907
    %v1326 = vpack.c.b16 %v910, %v908
    %v1327 = vpack.c.b16 %v913, %v911
    %v1328 = vpack.c.b16 %v914, %v912
    %v1329 = vpack.c.b16 %v917, %v915
    %v1330 = vpack.c.b16 %v918, %v916
    %v1331 = vpack.c.b16 %v921, %v919
    %v1332 = vpack.c.b16 %v922, %v920
    %v1333 = vpack.c.b16 %v925, %v923
    %v1334 = vpack.c.b16 %v926, %v924
    %v1335 = vpack.c.b16 %v929, %v927
    %v1336 = vpack.c.b16 %v930, %v928
    %v1337 = vpack.c.b16 %v933, %v931
    %v1338 = vpack.c.b16 %v934, %v932
    %v1339 = vpack.c.b16 %v937, %v935
    %v1340 = vpack.c.b16 %v938, %v936
    %v1341 = vpack.c.b16 %v941, %v939
    %v1342 = vpack.c.b16 %v942, %v940
    %v1343 = vpack.c.b16 %v945, %v943
    %v1344 = vpack.c.b16 %v946, %v944
    %v1345 = vpack.c.b16 %v949, %v947
    %v1346 = vpack.c.b16 %v950, %v948
    %v1347 = vpack.c.b16 %v953, %v951
    %v1348 = vpack.c.b16 %v954, %v952
    %v1349 = vpack.c.b16 %v957, %v955
    %v1350 = vpack.c.b16 %v958, %v956
    %v1351 = vpack.c.b16 %v961, %v959
    %v1352 = vpack.c.b16 %v962, %v960
    %v1353 = vpack.c.b16 %v965, %v963
    %v1354 = vpack.c.b16 %v966, %v964
    %v1355 = vpack.c.b16 %v969, %v967
    %v1356 = vpack.c.b16 %v970, %v968
    %v1357 = vpack.c.b16 %v973, %v971
    %v1358 = vpack.c.b16 %v974, %v972
    %v1359 = vpack.c.b16 %v977, %v975
    %v1360 = vpack.c.b16 %v978, %v976
    %v1361 = vpack.c.b16 %v981, %v979
    %v1362 = vpack.c.b16 %v982, %v980
    %v1363 = vpack.c.b16 %v985, %v983
    %v1364 = vpack.c.b16 %v986, %v984
    %v1365 = vpack.c.b16 %v989, %v987
    %v1366 = vpack.c.b16 %v990, %v988
    %v1367 = vpack.c.b16 %v993, %v991
    %v1368 = vpack.c.b16 %v994, %v992
    %v1369 = vpack.c.b16 %v997, %v995
    %v1370 = vpack.c.b16 %v998, %v996
    %v1371 = vpack.c.b16 %v1001, %v999
    %v1372 = vpack.c.b16 %v1002, %v1000
    %v1373 = vpack.c.b16 %v1005, %v1003
    %v1374 = vpack.c.b16 %v1006, %v1004
    %v1375 = vpack.c.b16 %v1009, %v1007
    %v1376 = vpack.c.b16 %v1010, %v1008
    %v1377 = vpack.c.b16 %v1013, %v1011
    %v1378 = vpack.c.b16 %v1014, %v1012
    %v1379 = vpack.c.b16 %v1017, %v1015
    %v1380 = vpack.c.b16 %v1018, %v1016
    %v1381 = vpack.c.b16 %v1021, %v1019
    %v1382 = vpack.c.b16 %v1022, %v1020
    %v1383 = vpack.c.b16 %v1025, %v1023
    %v1384 = vpack.c.b16 %v1026, %v1024
    %v1385 = vpack.c.b16 %v1029, %v1027
    %v1386 = vpack.c.b16 %v1030, %v1028
    %v1387 = vpack.c.b16 %v1033, %v1031
    %v1388 = vpack.c.b16 %v1034, %v1032
    %v1389 = vpack.c.b16 %v1037, %v1035
    %v1390 = vpack.c.b16 %v1038, %v1036
    %v1391 = vpack.c.b16 %v1041, %v1039
    %v1392 = vpack.c.b16 %v1042, %v1040
    %v1393 = vpack.c.b16 %v1045, %v1043
    %v1394 = vpack.c.b16 %v1046, %v1044
    %v1395 = vpack.c.b16 %v1049, %v1047
    %v1396 = vpack.c.b16 %v1050, %v1048
    %v1397 = vpack.c.b16 %v1053, %v1051
    %v1398 = vpack.c.b16 %v1054, %v1052
    %v1399 = vpack.c.b16 %v1057, %v1055
    %v1400 = vpack.c.b16 %v1058, %v1056
    %v1401 = vpack.c.b16 %v1061, %v1059
    %v1402 = vpack.c.b16 %v1062, %v1060
    %v1403 = vpack.c.b16 %v1065, %v1063
    %v1404 = vpack.c.b16 %v1066, %v1064
    %v1405 = vpack.c.b16 %v1069, %v1067
    %v1406 = vpack.c.b16 %v1070, %v1068
    %v1407 = vpack.c.b16 %v1073, %v1071
    %v1408 = vpack.c.b16 %v1074, %v1072
    %v1409 = vpack.c.b16 %v1077, %v1075
    %v1410 = vpack.c.b16 %v1078, %v1076
    %v1411 = vpack.c.b16 %v1081, %v1079
    %v1412 = vpack.c.b16 %v1082, %v1080
    %v1413 = vpack.c.b16 %v1085, %v1083
    %v1414 = vpack.c.b16 %v1086, %v1084
    %v1415 = vpack.c.b16 %v1089, %v1087
    %v1416 = vpack.c.b16 %v1090, %v1088
    %v1417 = vpack.c.b16 %v1093, %v1091
    %v1418 = vpack.c.b16 %v1094, %v1092
    %v1419 = vpack.c.b16 %v1097, %v1095
    %v1420 = vpack.c.b16 %v1098, %v1096
    %v1421 = vpack.c.b16 %v1101, %v1099
    %v1422 = vpack.c.b16 %v1102, %v1100
    %v1423 = vpack.c.b16 %v1105, %v1103
    %v1424 = vpack.c.b16 %v1106, %v1104
    %v1425 = vpack.c.b16 %v1109, %v1107
    %v1426 = vpack.c.b16 %v1110, %v1108
    %v1427 = vpack.c.b16 %v1113, %v1111
    %v1428 = vpack.c.b16 %v1114, %v1112
    %v1429 = vpack.c.b16 %v1117, %v1115
    %v1430 = vpack.c.b16 %v1118, %v1116
    %v1431 = vpack.c.b16 %v1121, %v1119
    %v1432 = vpack.c.b16 %v1122, %v1120
    %v1433 = vpack.c.b16 %v1125, %v1123
    %v1434 = vpack.c.b16 %v1126, %v1124
    %v1435 = vpack.c.b16 %v1129, %v1127
    %v1436 = vpack.c.b16 %v1130, %v1128
    %v1437 = vpack.c.b16 %v1133, %v1131
    %v1438 = vpack.c.b16 %v1134, %v1132
    %v1439 = vpack.c.b16 %v1137, %v1135
    %v1440 = vpack.c.b16 %v1138, %v1136
    %v1441 = vpack.c.b16 %v1141, %v1139
    %v1442 = vpack.c.b16 %v1142, %v1140
    %v1443 = vpack.c.b16 %v1145, %v1143
    %v1444 = vpack.c.b16 %v1146, %v1144
    %v1445 = vpack.c.b16 %v1149, %v1147
    %v1446 = vpack.c.b16 %v1150, %v1148
    %v1447 = vpack.c.b16 %v1153, %v1151
    %v1448 = vpack.c.b16 %v1154, %v1152
    %v1449 = vpack.c.b16 %v1157, %v1155
    %v1450 = vpack.c.b16 %v1158, %v1156
    %v1451 = vpack.c.b16 %v1161, %v1159
    %v1452 = vpack.c.b16 %v1162, %v1160
    %v1453 = vpack.c.b16 %v1165, %v1163
    %v1454 = vpack.c.b16 %v1166, %v1164
    %v1455 = vpack.c.b16 %v1169, %v1167
    %v1456 = vpack.c.b16 %v1170, %v1168
    %v1457 = vpack.c.b16 %v1173, %v1171
    %v1458 = vpack.c.b16 %v1174, %v1172
    %v1459 = vpack.c.b16 %v1177, %v1175
    %v1460 = vpack.c.b16 %v1178, %v1176
    %v1461 = vpack.c.b16 %v1181, %v1179
    %v1462 = vpack.c.b16 %v1182, %v1180
    %v1463 = vpack.c.b16 %v1185, %v1183
    %v1464 = vpack.c.b16 %v1186, %v1184
    %v1465 = vpack.c.b16 %v1189, %v1187
    %v1466 = vpack.c.b16 %v1190, %v1188
    %v1467 = vpack.c.b16 %v1193, %v1191
    %v1468 = vpack.c.b16 %v1194, %v1192
    %v1469 = vpack.c.b16 %v1197, %v1195
    %v1470 = vpack.c.b16 %v1198, %v1196
    %v1471 = vpack.c.b16 %v1201, %v1199
    %v1472 = vpack.c.b16 %v1202, %v1200
    %v1473 = vpack.c.b16 %v1205, %v1203
    %v1474 = vpack.c.b16 %v1206, %v1204
    %v1475 = vpack.c.b16 %v1209, %v1207
    %v1476 = vpack.c.b16 %v1210, %v1208
    %v1477 = vpack.c.b16 %v1213, %v1211
    %v1478 = vpack.c.b16 %v1214, %v1212
    %v1479 = vpack.c.b16 %v1217, %v1215
    %v1480 = vpack.c.b16 %v1218, %v1216
    %v1481 = vpack.c.b16 %v1221, %v1219
    %v1482 = vpack.c.b16 %v1222, %v1220
    %v1483 = vpack.c.b16 %v1225, %v1223
    %v1484 = vpack.c.b16 %v1226, %v1224
    %v1485 = vpack.c.b16 %v1229, %v1227
    %v1486 = vpack.c.b16 %v1230, %v1228
    %1743 = vmatprep.subr.bf16.mxu0 %v1246
    %1744 = vmatpush1.bf16.msra.mxu0 %v1245
    %1745 = vmatprep.subr.bf16.mxu0 %v1244
    %1746 = vmatpush1.bf16.msra.mxu0 %v1243
    %1747 = vmatprep.subr.bf16.mxu0 %v1242
    %1748 = vmatpush1.bf16.msra.mxu0 %v1241
    %1749 = vmatprep.subr.bf16.mxu0 %v1240
    %1750 = vmatpush1.bf16.msra.mxu0 %v1239
    %1751 = vmatprep.subr.bf16.mxu0 %v1238
    %1752 = vmatpush1.bf16.msra.mxu0 %v1237
    %1753 = vmatprep.subr.bf16.mxu0 %v1236
    %1754 = vmatpush1.bf16.msra.mxu0 %v1235
    %1755 = vmatprep.subr.bf16.mxu0 %v1234
    %1756 = vmatpush1.bf16.msra.mxu0 %v1233
    %1757 = vmatprep.subr.bf16.mxu0 %v1232
    %1758 = vmatpush1.bf16.msra.mxu0 %v1231
    %1759 = vmatprep.subr.bf16.mxu0 %v1262
    %1760 = vmatpush2.bf16.msra.mxu0 %v1261
    %1761 = vmatprep.subr.bf16.mxu0 %v1260
    %1762 = vmatpush2.bf16.msra.mxu0 %v1259
    %1763 = vmatprep.subr.bf16.mxu0 %v1258
    %1764 = vmatpush2.bf16.msra.mxu0 %v1257
    %1765 = vmatprep.subr.bf16.mxu0 %v1256
    %1766 = vmatpush2.bf16.msra.mxu0 %v1255
    %1767 = vmatprep.subr.bf16.mxu0 %v1254
    %1768 = vmatpush2.bf16.msra.mxu0 %v1253
    %1769 = vmatprep.subr.bf16.mxu0 %v1252
    %1770 = vmatpush2.bf16.msra.mxu0 %v1251
    %1771 = vmatprep.subr.bf16.mxu0 %v1250
    %1772 = vmatpush2.bf16.msra.mxu0 %v1249
    %1773 = vmatprep.subr.bf16.mxu0 %v1248
    %1774 = vmatpush2.bf16.msra.mxu0 %v1247
    %1775 = vmatprep.mubr.bf16.mxu0 %v400
    %1776 = vmatmul.mubr.bf16.gmra.mxu0 %v399
    %v1777 = vpop.f32.mrf.mxu0
    %v1778 = vadd.f32 0.0, %v1777
    %v1779 = vpop.f32.mrf.mxu0
    %v1780 = vadd.f32 0.0, %v1779
    %v1781 = vpop.f32.mrf.mxu0
    %v1782 = vadd.f32 0.0, %v1781
    %v1783 = vpop.f32.mrf.mxu0
    %v1784 = vadd.f32 0.0, %v1783
    %1785 = vmatprep.mubr.bf16.mxu0 %v416
    %1786 = vmatmul.mubr.bf16.gmra.mxu0 %v415
    %v1787 = vpop.f32.mrf.mxu0
    %v1788 = vadd.f32 0.0, %v1787
    %v1789 = vpop.f32.mrf.mxu0
    %v1790 = vadd.f32 0.0, %v1789
    %v1791 = vpop.f32.mrf.mxu0
    %v1792 = vadd.f32 0.0, %v1791
    %v1793 = vpop.f32.mrf.mxu0
    %v1794 = vadd.f32 0.0, %v1793
    %1795 = vdwg.mxu0
    %1796 = vmatprep.subr.bf16.mxu0 %v1278
    %1797 = vmatpush1.bf16.msra.mxu0 %v1277
    %1798 = vmatprep.subr.bf16.mxu0 %v1276
    %1799 = vmatpush1.bf16.msra.mxu0 %v1275
    %1800 = vmatprep.subr.bf16.mxu0 %v1274
    %1801 = vmatpush1.bf16.msra.mxu0 %v1273
    %1802 = vmatprep.subr.bf16.mxu0 %v1272
    %1803 = vmatpush1.bf16.msra.mxu0 %v1271
    %1804 = vmatprep.subr.bf16.mxu0 %v1270
    %1805 = vmatpush1.bf16.msra.mxu0 %v1269
    %1806 = vmatprep.subr.bf16.mxu0 %v1268
    %1807 = vmatpush1.bf16.msra.mxu0 %v1267
    %1808 = vmatprep.subr.bf16.mxu0 %v1266
    %1809 = vmatpush1.bf16.msra.mxu0 %v1265
    %1810 = vmatprep.subr.bf16.mxu0 %v1264
    %1811 = vmatpush1.bf16.msra.mxu0 %v1263
    %1812 = vmatprep.subr.bf16.mxu0 %v1294
    %1813 = vmatpush2.bf16.msra.mxu0 %v1293
    %1814 = vmatprep.subr.bf16.mxu0 %v1292
    %1815 = vmatpush2.bf16.msra.mxu0 %v1291
    %1816 = vmatprep.subr.bf16.mxu0 %v1290
    %1817 = vmatpush2.bf16.msra.mxu0 %v1289
    %1818 = vmatprep.subr.bf16.mxu0 %v1288
    %1819 = vmatpush2.bf16.msra.mxu0 %v1287
    %1820 = vmatprep.subr.bf16.mxu0 %v1286
    %1821 = vmatpush2.bf16.msra.mxu0 %v1285
    %1822 = vmatprep.subr.bf16.mxu0 %v1284
    %1823 = vmatpush2.bf16.msra.mxu0 %v1283
    %1824 = vmatprep.subr.bf16.mxu0 %v1282
    %1825 = vmatpush2.bf16.msra.mxu0 %v1281
    %1826 = vmatprep.subr.bf16.mxu0 %v1280
    %1827 = vmatpush2.bf16.msra.mxu0 %v1279
    %1828 = vmatprep.mubr.bf16.mxu0 %v402
    %1829 = vmatmul.mubr.bf16.gmra.mxu0 %v401
    %v1830 = vpop.f32.mrf.mxu0
    %v1831 = vadd.f32 %v1778, %v1830
    %v1832 = vpop.f32.mrf.mxu0
    %v1833 = vadd.f32 %v1780, %v1832
    %v1834 = vpop.f32.mrf.mxu0
    %v1835 = vadd.f32 %v1782, %v1834
    %v1836 = vpop.f32.mrf.mxu0
    %v1837 = vadd.f32 %v1784, %v1836
    %1838 = vmatprep.mubr.bf16.mxu0 %v418
    %1839 = vmatmul.mubr.bf16.gmra.mxu0 %v417
    %v1840 = vpop.f32.mrf.mxu0
    %v1841 = vadd.f32 %v1788, %v1840
    %v1842 = vpop.f32.mrf.mxu0
    %v1843 = vadd.f32 %v1790, %v1842
    %v1844 = vpop.f32.mrf.mxu0
    %v1845 = vadd.f32 %v1792, %v1844
    %v1846 = vpop.f32.mrf.mxu0
    %v1847 = vadd.f32 %v1794, %v1846
    %1848 = vdwg.mxu0
    %1849 = vmatprep.subr.bf16.mxu0 %v1310
    %1850 = vmatpush1.bf16.msra.mxu0 %v1309
    %1851 = vmatprep.subr.bf16.mxu0 %v1308
    %1852 = vmatpush1.bf16.msra.mxu0 %v1307
    %1853 = vmatprep.subr.bf16.mxu0 %v1306
    %1854 = vmatpush1.bf16.msra.mxu0 %v1305
    %1855 = vmatprep.subr.bf16.mxu0 %v1304
    %1856 = vmatpush1.bf16.msra.mxu0 %v1303
    %1857 = vmatprep.subr.bf16.mxu0 %v1302
    %1858 = vmatpush1.bf16.msra.mxu0 %v1301
    %1859 = vmatprep.subr.bf16.mxu0 %v1300
    %1860 = vmatpush1.bf16.msra.mxu0 %v1299
    %1861 = vmatprep.subr.bf16.mxu0 %v1298
    %1862 = vmatpush1.bf16.msra.mxu0 %v1297
    %1863 = vmatprep.subr.bf16.mxu0 %v1296
    %1864 = vmatpush1.bf16.msra.mxu0 %v1295
    %1865 = vmatprep.subr.bf16.mxu0 %v1326
    %1866 = vmatpush2.bf16.msra.mxu0 %v1325
    %1867 = vmatprep.subr.bf16.mxu0 %v1324
    %1868 = vmatpush2.bf16.msra.mxu0 %v1323
    %1869 = vmatprep.subr.bf16.mxu0 %v1322
    %1870 = vmatpush2.bf16.msra.mxu0 %v1321
    %1871 = vmatprep.subr.bf16.mxu0 %v1320
    %1872 = vmatpush2.bf16.msra.mxu0 %v1319
    %1873 = vmatprep.subr.bf16.mxu0 %v1318
    %1874 = vmatpush2.bf16.msra.mxu0 %v1317
    %1875 = vmatprep.subr.bf16.mxu0 %v1316
    %1876 = vmatpush2.bf16.msra.mxu0 %v1315
    %1877 = vmatprep.subr.bf16.mxu0 %v1314
    %1878 = vmatpush2.bf16.msra.mxu0 %v1313
    %1879 = vmatprep.subr.bf16.mxu0 %v1312
    %1880 = vmatpush2.bf16.msra.mxu0 %v1311
    %1881 = vmatprep.mubr.bf16.mxu0 %v404
    %1882 = vmatmul.mubr.bf16.gmra.mxu0 %v403
    %v1883 = vpop.f32.mrf.mxu0
    %v1884 = vadd.f32 %v1831, %v1883
    %v1885 = vpop.f32.mrf.mxu0
    %v1886 = vadd.f32 %v1833, %v1885
    %v1887 = vpop.f32.mrf.mxu0
    %v1888 = vadd.f32 %v1835, %v1887
    %v1889 = vpop.f32.mrf.mxu0
    %v1890 = vadd.f32 %v1837, %v1889
    %1891 = vmatprep.mubr.bf16.mxu0 %v420
    %1892 = vmatmul.mubr.bf16.gmra.mxu0 %v419
    %v1893 = vpop.f32.mrf.mxu0
    %v1894 = vadd.f32 %v1841, %v1893
    %v1895 = vpop.f32.mrf.mxu0
    %v1896 = vadd.f32 %v1843, %v1895
    %v1897 = vpop.f32.mrf.mxu0
    %v1898 = vadd.f32 %v1845, %v1897
    %v1899 = vpop.f32.mrf.mxu0
    %v1900 = vadd.f32 %v1847, %v1899
    %1901 = vdwg.mxu0
    %1902 = vmatprep.subr.bf16.mxu0 %v1342
    %1903 = vmatpush1.bf16.msra.mxu0 %v1341
    %1904 = vmatprep.subr.bf16.mxu0 %v1340
    %1905 = vmatpush1.bf16.msra.mxu0 %v1339
    %1906 = vmatprep.subr.bf16.mxu0 %v1338
    %1907 = vmatpush1.bf16.msra.mxu0 %v1337
    %1908 = vmatprep.subr.bf16.mxu0 %v1336
    %1909 = vmatpush1.bf16.msra.mxu0 %v1335
    %1910 = vmatprep.subr.bf16.mxu0 %v1334
    %1911 = vmatpush1.bf16.msra.mxu0 %v1333
    %1912 = vmatprep.subr.bf16.mxu0 %v1332
    %1913 = vmatpush1.bf16.msra.mxu0 %v1331
    %1914 = vmatprep.subr.bf16.mxu0 %v1330
    %1915 = vmatpush1.bf16.msra.mxu0 %v1329
    %1916 = vmatprep.subr.bf16.mxu0 %v1328
    %1917 = vmatpush1.bf16.msra.mxu0 %v1327
    %1918 = vmatprep.subr.bf16.mxu0 %v1358
    %1919 = vmatpush2.bf16.msra.mxu0 %v1357
    %1920 = vmatprep.subr.bf16.mxu0 %v1356
    %1921 = vmatpush2.bf16.msra.mxu0 %v1355
    %1922 = vmatprep.subr.bf16.mxu0 %v1354
    %1923 = vmatpush2.bf16.msra.mxu0 %v1353
    %1924 = vmatprep.subr.bf16.mxu0 %v1352
    %1925 = vmatpush2.bf16.msra.mxu0 %v1351
    %1926 = vmatprep.subr.bf16.mxu0 %v1350
    %1927 = vmatpush2.bf16.msra.mxu0 %v1349
    %1928 = vmatprep.subr.bf16.mxu0 %v1348
    %1929 = vmatpush2.bf16.msra.mxu0 %v1347
    %1930 = vmatprep.subr.bf16.mxu0 %v1346
    %1931 = vmatpush2.bf16.msra.mxu0 %v1345
    %1932 = vmatprep.subr.bf16.mxu0 %v1344
    %1933 = vmatpush2.bf16.msra.mxu0 %v1343
    %1934 = vmatprep.mubr.bf16.mxu0 %v406
    %1935 = vmatmul.mubr.bf16.gmra.mxu0 %v405
    %v1936 = vpop.f32.mrf.mxu0
    %v1937 = vadd.f32 %v1884, %v1936
    %v1938 = vpop.f32.mrf.mxu0
    %v1939 = vadd.f32 %v1886, %v1938
    %v1940 = vpop.f32.mrf.mxu0
    %v1941 = vadd.f32 %v1888, %v1940
    %v1942 = vpop.f32.mrf.mxu0
    %v1943 = vadd.f32 %v1890, %v1942
    %1944 = vmatprep.mubr.bf16.mxu0 %v422
    %1945 = vmatmul.mubr.bf16.gmra.mxu0 %v421
    %v1946 = vpop.f32.mrf.mxu0
    %v1947 = vadd.f32 %v1894, %v1946
    %v1948 = vpop.f32.mrf.mxu0
    %v1949 = vadd.f32 %v1896, %v1948
    %v1950 = vpop.f32.mrf.mxu0
    %v1951 = vadd.f32 %v1898, %v1950
    %v1952 = vpop.f32.mrf.mxu0
    %v1953 = vadd.f32 %v1900, %v1952
    %1954 = vdwg.mxu0
    %1955 = vmatprep.subr.bf16.mxu0 %v1374
    %1956 = vmatpush1.bf16.msra.mxu0 %v1373
    %1957 = vmatprep.subr.bf16.mxu0 %v1372
    %1958 = vmatpush1.bf16.msra.mxu0 %v1371
    %1959 = vmatprep.subr.bf16.mxu0 %v1370
    %1960 = vmatpush1.bf16.msra.mxu0 %v1369
    %1961 = vmatprep.subr.bf16.mxu0 %v1368
    %1962 = vmatpush1.bf16.msra.mxu0 %v1367
    %1963 = vmatprep.subr.bf16.mxu0 %v1366
    %1964 = vmatpush1.bf16.msra.mxu0 %v1365
    %1965 = vmatprep.subr.bf16.mxu0 %v1364
    %1966 = vmatpush1.bf16.msra.mxu0 %v1363
    %1967 = vmatprep.subr.bf16.mxu0 %v1362
    %1968 = vmatpush1.bf16.msra.mxu0 %v1361
    %1969 = vmatprep.subr.bf16.mxu0 %v1360
    %1970 = vmatpush1.bf16.msra.mxu0 %v1359
    %1971 = vmatprep.subr.bf16.mxu0 %v1390
    %1972 = vmatpush2.bf16.msra.mxu0 %v1389
    %1973 = vmatprep.subr.bf16.mxu0 %v1388
    %1974 = vmatpush2.bf16.msra.mxu0 %v1387
    %1975 = vmatprep.subr.bf16.mxu0 %v1386
    %1976 = vmatpush2.bf16.msra.mxu0 %v1385
    %1977 = vmatprep.subr.bf16.mxu0 %v1384
    %1978 = vmatpush2.bf16.msra.mxu0 %v1383
    %1979 = vmatprep.subr.bf16.mxu0 %v1382
    %1980 = vmatpush2.bf16.msra.mxu0 %v1381
    %1981 = vmatprep.subr.bf16.mxu0 %v1380
    %1982 = vmatpush2.bf16.msra.mxu0 %v1379
    %1983 = vmatprep.subr.bf16.mxu0 %v1378
    %1984 = vmatpush2.bf16.msra.mxu0 %v1377
    %1985 = vmatprep.subr.bf16.mxu0 %v1376
    %1986 = vmatpush2.bf16.msra.mxu0 %v1375
    %1987 = vmatprep.mubr.bf16.mxu0 %v408
    %1988 = vmatmul.mubr.bf16.gmra.mxu0 %v407
    %v1989 = vpop.f32.mrf.mxu0
    %v1990 = vadd.f32 %v1937, %v1989
    %v1991 = vpop.f32.mrf.mxu0
    %v1992 = vadd.f32 %v1939, %v1991
    %v1993 = vpop.f32.mrf.mxu0
    %v1994 = vadd.f32 %v1941, %v1993
    %v1995 = vpop.f32.mrf.mxu0
    %v1996 = vadd.f32 %v1943, %v1995
    %1997 = vmatprep.mubr.bf16.mxu0 %v424
    %1998 = vmatmul.mubr.bf16.gmra.mxu0 %v423
    %v1999 = vpop.f32.mrf.mxu0
    %v2000 = vadd.f32 %v1947, %v1999
    %v2001 = vpop.f32.mrf.mxu0
    %v2002 = vadd.f32 %v1949, %v2001
    %v2003 = vpop.f32.mrf.mxu0
    %v2004 = vadd.f32 %v1951, %v2003
    %v2005 = vpop.f32.mrf.mxu0
    %v2006 = vadd.f32 %v1953, %v2005
    %2007 = vdwg.mxu0
    %2008 = vmatprep.subr.bf16.mxu0 %v1406
    %2009 = vmatpush1.bf16.msra.mxu0 %v1405
    %2010 = vmatprep.subr.bf16.mxu0 %v1404
    %2011 = vmatpush1.bf16.msra.mxu0 %v1403
    %2012 = vmatprep.subr.bf16.mxu0 %v1402
    %2013 = vmatpush1.bf16.msra.mxu0 %v1401
    %2014 = vmatprep.subr.bf16.mxu0 %v1400
    %2015 = vmatpush1.bf16.msra.mxu0 %v1399
    %2016 = vmatprep.subr.bf16.mxu0 %v1398
    %2017 = vmatpush1.bf16.msra.mxu0 %v1397
    %2018 = vmatprep.subr.bf16.mxu0 %v1396
    %2019 = vmatpush1.bf16.msra.mxu0 %v1395
    %2020 = vmatprep.subr.bf16.mxu0 %v1394
    %2021 = vmatpush1.bf16.msra.mxu0 %v1393
    %2022 = vmatprep.subr.bf16.mxu0 %v1392
    %2023 = vmatpush1.bf16.msra.mxu0 %v1391
    %2024 = vmatprep.subr.bf16.mxu0 %v1422
    %2025 = vmatpush2.bf16.msra.mxu0 %v1421
    %2026 = vmatprep.subr.bf16.mxu0 %v1420
    %2027 = vmatpush2.bf16.msra.mxu0 %v1419
    %2028 = vmatprep.subr.bf16.mxu0 %v1418
    %2029 = vmatpush2.bf16.msra.mxu0 %v1417
    %2030 = vmatprep.subr.bf16.mxu0 %v1416
    %2031 = vmatpush2.bf16.msra.mxu0 %v1415
    %2032 = vmatprep.subr.bf16.mxu0 %v1414
    %2033 = vmatpush2.bf16.msra.mxu0 %v1413
    %2034 = vmatprep.subr.bf16.mxu0 %v1412
    %2035 = vmatpush2.bf16.msra.mxu0 %v1411
    %2036 = vmatprep.subr.bf16.mxu0 %v1410
    %2037 = vmatpush2.bf16.msra.mxu0 %v1409
    %2038 = vmatprep.subr.bf16.mxu0 %v1408
    %2039 = vmatpush2.bf16.msra.mxu0 %v1407
    %2040 = vmatprep.mubr.bf16.mxu0 %v410
    %2041 = vmatmul.mubr.bf16.gmra.mxu0 %v409
    %v2042 = vpop.f32.mrf.mxu0
    %v2043 = vadd.f32 %v1990, %v2042
    %v2044 = vpop.f32.mrf.mxu0
    %v2045 = vadd.f32 %v1992, %v2044
    %v2046 = vpop.f32.mrf.mxu0
    %v2047 = vadd.f32 %v1994, %v2046
    %v2048 = vpop.f32.mrf.mxu0
    %v2049 = vadd.f32 %v1996, %v2048
    %2050 = vmatprep.mubr.bf16.mxu0 %v426
    %2051 = vmatmul.mubr.bf16.gmra.mxu0 %v425
    %v2052 = vpop.f32.mrf.mxu0
    %v2053 = vadd.f32 %v2000, %v2052
    %v2054 = vpop.f32.mrf.mxu0
    %v2055 = vadd.f32 %v2002, %v2054
    %v2056 = vpop.f32.mrf.mxu0
    %v2057 = vadd.f32 %v2004, %v2056
    %v2058 = vpop.f32.mrf.mxu0
    %v2059 = vadd.f32 %v2006, %v2058
    %2060 = vdwg.mxu0
    %2061 = vmatprep.subr.bf16.mxu0 %v1438
    %2062 = vmatpush1.bf16.msra.mxu0 %v1437
    %2063 = vmatprep.subr.bf16.mxu0 %v1436
    %2064 = vmatpush1.bf16.msra.mxu0 %v1435
    %2065 = vmatprep.subr.bf16.mxu0 %v1434
    %2066 = vmatpush1.bf16.msra.mxu0 %v1433
    %2067 = vmatprep.subr.bf16.mxu0 %v1432
    %2068 = vmatpush1.bf16.msra.mxu0 %v1431
    %2069 = vmatprep.subr.bf16.mxu0 %v1430
    %2070 = vmatpush1.bf16.msra.mxu0 %v1429
    %2071 = vmatprep.subr.bf16.mxu0 %v1428
    %2072 = vmatpush1.bf16.msra.mxu0 %v1427
    %2073 = vmatprep.subr.bf16.mxu0 %v1426
    %2074 = vmatpush1.bf16.msra.mxu0 %v1425
    %2075 = vmatprep.subr.bf16.mxu0 %v1424
    %2076 = vmatpush1.bf16.msra.mxu0 %v1423
    %2077 = vmatprep.subr.bf16.mxu0 %v1454
    %2078 = vmatpush2.bf16.msra.mxu0 %v1453
    %2079 = vmatprep.subr.bf16.mxu0 %v1452
    %2080 = vmatpush2.bf16.msra.mxu0 %v1451
    %2081 = vmatprep.subr.bf16.mxu0 %v1450
    %2082 = vmatpush2.bf16.msra.mxu0 %v1449
    %2083 = vmatprep.subr.bf16.mxu0 %v1448
    %2084 = vmatpush2.bf16.msra.mxu0 %v1447
    %2085 = vmatprep.subr.bf16.mxu0 %v1446
    %2086 = vmatpush2.bf16.msra.mxu0 %v1445
    %2087 = vmatprep.subr.bf16.mxu0 %v1444
    %2088 = vmatpush2.bf16.msra.mxu0 %v1443
    %2089 = vmatprep.subr.bf16.mxu0 %v1442
    %2090 = vmatpush2.bf16.msra.mxu0 %v1441
    %2091 = vmatprep.subr.bf16.mxu0 %v1440
    %2092 = vmatpush2.bf16.msra.mxu0 %v1439
    %2093 = vmatprep.mubr.bf16.mxu0 %v412
    %2094 = vmatmul.mubr.bf16.gmra.mxu0 %v411
    %v2095 = vpop.f32.mrf.mxu0
    %v2096 = vadd.f32 %v2043, %v2095
    %v2097 = vpop.f32.mrf.mxu0
    %v2098 = vadd.f32 %v2045, %v2097
    %v2099 = vpop.f32.mrf.mxu0
    %v2100 = vadd.f32 %v2047, %v2099
    %v2101 = vpop.f32.mrf.mxu0
    %v2102 = vadd.f32 %v2049, %v2101
    %2103 = vmatprep.mubr.bf16.mxu0 %v428
    %2104 = vmatmul.mubr.bf16.gmra.mxu0 %v427
    %v2105 = vpop.f32.mrf.mxu0
    %v2106 = vadd.f32 %v2053, %v2105
    %v2107 = vpop.f32.mrf.mxu0
    %v2108 = vadd.f32 %v2055, %v2107
    %v2109 = vpop.f32.mrf.mxu0
    %v2110 = vadd.f32 %v2057, %v2109
    %v2111 = vpop.f32.mrf.mxu0
    %v2112 = vadd.f32 %v2059, %v2111
    %2113 = vdwg.mxu0
    %2114 = vmatprep.subr.bf16.mxu0 %v1470
    %2115 = vmatpush1.bf16.msra.mxu0 %v1469
    %2116 = vmatprep.subr.bf16.mxu0 %v1468
    %2117 = vmatpush1.bf16.msra.mxu0 %v1467
    %2118 = vmatprep.subr.bf16.mxu0 %v1466
    %2119 = vmatpush1.bf16.msra.mxu0 %v1465
    %2120 = vmatprep.subr.bf16.mxu0 %v1464
    %2121 = vmatpush1.bf16.msra.mxu0 %v1463
    %2122 = vmatprep.subr.bf16.mxu0 %v1462
    %2123 = vmatpush1.bf16.msra.mxu0 %v1461
    %2124 = vmatprep.subr.bf16.mxu0 %v1460
    %2125 = vmatpush1.bf16.msra.mxu0 %v1459
    %2126 = vmatprep.subr.bf16.mxu0 %v1458
    %2127 = vmatpush1.bf16.msra.mxu0 %v1457
    %2128 = vmatprep.subr.bf16.mxu0 %v1456
    %2129 = vmatpush1.bf16.msra.mxu0 %v1455
    %2130 = vmatprep.subr.bf16.mxu0 %v1486
    %2131 = vmatpush2.bf16.msra.mxu0 %v1485
    %2132 = vmatprep.subr.bf16.mxu0 %v1484
    %2133 = vmatpush2.bf16.msra.mxu0 %v1483
    %2134 = vmatprep.subr.bf16.mxu0 %v1482
    %2135 = vmatpush2.bf16.msra.mxu0 %v1481
    %2136 = vmatprep.subr.bf16.mxu0 %v1480
    %2137 = vmatpush2.bf16.msra.mxu0 %v1479
    %2138 = vmatprep.subr.bf16.mxu0 %v1478
    %2139 = vmatpush2.bf16.msra.mxu0 %v1477
    %2140 = vmatprep.subr.bf16.mxu0 %v1476
    %2141 = vmatpush2.bf16.msra.mxu0 %v1475
    %2142 = vmatprep.subr.bf16.mxu0 %v1474
    %2143 = vmatpush2.bf16.msra.mxu0 %v1473
    %2144 = vmatprep.subr.bf16.mxu0 %v1472
    %2145 = vmatpush2.bf16.msra.mxu0 %v1471
    %2146 = vmatprep.mubr.bf16.mxu0 %v414
    %2147 = vmatmul.mubr.bf16.gmra.mxu0 %v413
    %v2148 = vpop.f32.mrf.mxu0
    %v2149 = vadd.f32 %v2096, %v2148
    %v2150 = vpop.f32.mrf.mxu0
    %v2151 = vadd.f32 %v2098, %v2150
    %v2152 = vpop.f32.mrf.mxu0
    %v2153 = vadd.f32 %v2100, %v2152
    %v2154 = vpop.f32.mrf.mxu0
    %v2155 = vadd.f32 %v2102, %v2154
    %2156 = vmatprep.mubr.bf16.mxu0 %v430
    %2157 = vmatmul.mubr.bf16.gmra.mxu0 %v429
    %v2158 = vpop.f32.mrf.mxu0
    %v2159 = vadd.f32 %v2106, %v2158
    %v2160 = vpop.f32.mrf.mxu0
    %v2161 = vadd.f32 %v2108, %v2160
    %v2162 = vpop.f32.mrf.mxu0
    %v2163 = vadd.f32 %v2110, %v2162
    %v2164 = vpop.f32.mrf.mxu0
    %v2165 = vadd.f32 %v2112, %v2164
    %2166 = vdwg.mxu0
    %v2167 = vadd.f32 %v2149, %v2153
    %v2168 = vrot.slane %v2167, 4
    %v2169 = vadd.f32 %v2167, %v2168
    %v2170 = vrot.slane %v2169, 2
    %v2171 = vadd.f32 %v2169, %v2170
    %v2172 = vrot.slane %v2171, 1
    %v2173 = vadd.f32 %v2171, %v2172
    %v2174 = vadd.f32 %v2159, %v2163
    %v2175 = vrot.slane %v2174, 4
    %v2176 = vadd.f32 %v2174, %v2175
    %v2177 = vrot.slane %v2176, 2
    %v2178 = vadd.f32 %v2176, %v2177
    %v2179 = vrot.slane %v2178, 1
    %v2180 = vadd.f32 %v2178, %v2179
    %v2181 = vrcp.pop 16.0
    %v2182 = vmul.f32 %v2173, %v2181
    %v2183 = vmul.f32 %v2180, %v2181
    %2184 = vst [vmem:[#allocation2] sm:$0x1] %v2182
    %2185 = vst [vmem:[#allocation2 + $0x1] sm:$0x1] %v2183
    %v2186 = vmax.f32 %v2149, 0.0
    %v2187 = vmax.f32 %v2153, 0.0
    %v2188 = vmax.f32 %v2159, 0.0
    %v2189 = vmax.f32 %v2163, 0.0
    %v2190 = vmax.f32 %v2186, %v2187
    %v2191 = vrot.slane %v2190, 4
    %v2192 = vmax.f32 %v2190, %v2191
    %v2193 = vrot.slane %v2192, 2
    %v2194 = vmax.f32 %v2192, %v2193
    %v2195 = vrot.slane %v2194, 1
    %v2196 = vmax.f32 %v2194, %v2195
    %v2197 = vmax.f32 %v2188, %v2189
    %v2198 = vrot.slane %v2197, 4
    %v2199 = vmax.f32 %v2197, %v2198
    %v2200 = vrot.slane %v2199, 2
    %v2201 = vmax.f32 %v2199, %v2200
    %v2202 = vrot.slane %v2201, 1
    %v2203 = vmax.f32 %v2201, %v2202
    %v2204 = vadd.f32 %v2196, 1e-05
    %v2205 = vadd.f32 %v2203, 1e-05
    %v2206 = vrcp.pop %v2204
    %v2207 = vrcp.pop %v2205
    %v2208 = vmul.f32 %v2186, %v2206
    %v2209 = vmul.f32 %v2187, %v2206
    %v2210 = vmul.f32 %v2188, %v2207
    %v2211 = vmul.f32 %v2189, %v2207
    %v2212 = vpack.c.bf16 %v2209, %v2208
    %v2213 = vpack.c.bf16 %v2211, %v2210
    %v2214 = vpack.c.bf16 %v2155, %v2151
    %v2215 = vpack.c.bf16 %v2165, %v2161
    %2216 = vxpose.xlu0.c.b16.start [1/8] %v2212, 128
    %2217 = vxpose.xlu0.c.b16.cont [2/8] 0, 128
    %2218 = vxpose.xlu0.c.b16.cont [3/8] 0, 128
    %2219 = vxpose.xlu0.c.b16.cont [4/8] 0, 128
    %2220 = vxpose.xlu0.c.b16.cont [5/8] 0, 128
    %2221 = vxpose.xlu0.c.b16.cont [6/8] 0, 128
    %2222 = vxpose.xlu0.c.b16.cont [7/8] 0, 128
    %2223 = vxpose.xlu0.c.b16.end [8/8] 0, 128
    %v2224 = vpop.trf.xlu0
    %v2225 = vpop.trf.xlu0
    %v2226 = vpop.trf.xlu0
    %v2227 = vpop.trf.xlu0
    %v2228 = vpop.trf.xlu0
    %v2229 = vpop.trf.xlu0
    %v2230 = vpop.trf.xlu0
    %v2231 = vpop.trf.xlu0
    %vm2232 = vcmask 130048
    %v2234 = vsel %vm2232, %v2224, 0
    %v2237 = vsel %vm2232, %v2225, 0
    %v2240 = vsel %vm2232, %v2226, 0
    %v2243 = vsel %vm2232, %v2227, 0
    %v2246 = vsel %vm2232, %v2228, 0
    %v2249 = vsel %vm2232, %v2229, 0
    %v2252 = vsel %vm2232, %v2230, 0
    %v2255 = vsel %vm2232, %v2231, 0
    %2257 = vmatprep.subr.bf16.mxu0 0
    %2258 = vmatpush1.bf16.msra.mxu0 0
    %2259 = vmatprep.subr.bf16.mxu0 0
    %2260 = vmatpush1.bf16.msra.mxu0 0
    %2261 = vmatprep.subr.bf16.mxu0 0
    %2262 = vmatpush1.bf16.msra.mxu0 0
    %2263 = vmatprep.subr.bf16.mxu0 0
    %2264 = vmatpush1.bf16.msra.mxu0 0
    %2265 = vmatprep.subr.bf16.mxu0 0
    %2266 = vmatpush1.bf16.msra.mxu0 0
    %2267 = vmatprep.subr.bf16.mxu0 0
    %2268 = vmatpush1.bf16.msra.mxu0 0
    %2269 = vmatprep.subr.bf16.mxu0 0
    %2270 = vmatpush1.bf16.msra.mxu0 0
    %2271 = vmatprep.subr.bf16.mxu0 0
    %2272 = vmatpush1.bf16.msra.mxu0 %v2214
    %2273 = vmatprep.subr.bf16.mxu0 0
    %2274 = vmatpush2.bf16.msra.mxu0 0
    %2275 = vmatprep.subr.bf16.mxu0 0
    %2276 = vmatpush2.bf16.msra.mxu0 0
    %2277 = vmatprep.subr.bf16.mxu0 0
    %2278 = vmatpush2.bf16.msra.mxu0 0
    %2279 = vmatprep.subr.bf16.mxu0 0
    %2280 = vmatpush2.bf16.msra.mxu0 0
    %2281 = vmatprep.subr.bf16.mxu0 0
    %2282 = vmatpush2.bf16.msra.mxu0 0
    %2283 = vmatprep.subr.bf16.mxu0 0
    %2284 = vmatpush2.bf16.msra.mxu0 0
    %2285 = vmatprep.subr.bf16.mxu0 0
    %2286 = vmatpush2.bf16.msra.mxu0 0
    %2287 = vmatprep.subr.bf16.mxu0 0
    %2288 = vmatpush2.bf16.msra.mxu0 0
    %2289 = vmatprep.mubr.bf16.mxu0 0
    %2290 = vmatmul.mubr.bf16.gmra.mxu0 %v2234
    %v2291 = vpop.f32.mrf.mxu0
    %v2292 = vadd.f32 0.0, %v2291
    %v2293 = vpop.f32.mrf.mxu0
    %v2294 = vpop.f32.mrf.mxu0
    %v2295 = vadd.f32 0.0, %v2294
    %v2296 = vpop.f32.mrf.mxu0
    %2297 = vmatprep.mubr.bf16.mxu0 0
    %2298 = vmatmul.mubr.bf16.gmra.mxu0 %v2237
    %v2299 = vpop.f32.mrf.mxu0
    %v2300 = vadd.f32 0.0, %v2299
    %v2301 = vpop.f32.mrf.mxu0
    %v2302 = vpop.f32.mrf.mxu0
    %v2303 = vadd.f32 0.0, %v2302
    %v2304 = vpop.f32.mrf.mxu0
    %2305 = vmatprep.mubr.bf16.mxu0 0
    %2306 = vmatmul.mubr.bf16.gmra.mxu0 %v2240
    %v2307 = vpop.f32.mrf.mxu0
    %v2308 = vadd.f32 0.0, %v2307
    %v2309 = vpop.f32.mrf.mxu0
    %v2310 = vpop.f32.mrf.mxu0
    %v2311 = vadd.f32 0.0, %v2310
    %v2312 = vpop.f32.mrf.mxu0
    %2313 = vmatprep.mubr.bf16.mxu0 0
    %2314 = vmatmul.mubr.bf16.gmra.mxu0 %v2243
    %v2315 = vpop.f32.mrf.mxu0
    %v2316 = vadd.f32 0.0, %v2315
    %v2317 = vpop.f32.mrf.mxu0
    %v2318 = vpop.f32.mrf.mxu0
    %v2319 = vadd.f32 0.0, %v2318
    %v2320 = vpop.f32.mrf.mxu0
    %2321 = vmatprep.mubr.bf16.mxu0 0
    %2322 = vmatmul.mubr.bf16.gmra.mxu0 %v2246
    %v2323 = vpop.f32.mrf.mxu0
    %v2324 = vadd.f32 0.0, %v2323
    %v2325 = vpop.f32.mrf.mxu0
    %v2326 = vpop.f32.mrf.mxu0
    %v2327 = vadd.f32 0.0, %v2326
    %v2328 = vpop.f32.mrf.mxu0
    %2329 = vmatprep.mubr.bf16.mxu0 0
    %2330 = vmatmul.mubr.bf16.gmra.mxu0 %v2249
    %v2331 = vpop.f32.mrf.mxu0
    %v2332 = vadd.f32 0.0, %v2331
    %v2333 = vpop.f32.mrf.mxu0
    %v2334 = vpop.f32.mrf.mxu0
    %v2335 = vadd.f32 0.0, %v2334
    %v2336 = vpop.f32.mrf.mxu0
    %2337 = vmatprep.mubr.bf16.mxu0 0
    %2338 = vmatmul.mubr.bf16.gmra.mxu0 %v2252
    %v2339 = vpop.f32.mrf.mxu0
    %v2340 = vadd.f32 0.0, %v2339
    %v2341 = vpop.f32.mrf.mxu0
    %v2342 = vpop.f32.mrf.mxu0
    %v2343 = vadd.f32 0.0, %v2342
    %v2344 = vpop.f32.mrf.mxu0
    %2345 = vmatprep.mubr.bf16.mxu0 0
    %2346 = vmatmul.mubr.bf16.gmra.mxu0 %v2255
    %v2347 = vpop.f32.mrf.mxu0
    %v2348 = vadd.f32 0.0, %v2347
    %v2349 = vpop.f32.mrf.mxu0
    %v2350 = vpop.f32.mrf.mxu0
    %v2351 = vadd.f32 0.0, %v2350
    %v2352 = vpop.f32.mrf.mxu0
    %2353 = vdwg.mxu0
    %2354 = vxpose.xlu0.c.b16.start [1/8] %v2213, 128
    %2355 = vxpose.xlu0.c.b16.cont [2/8] 0, 128
    %2356 = vxpose.xlu0.c.b16.cont [3/8] 0, 128
    %2357 = vxpose.xlu0.c.b16.cont [4/8] 0, 128
    %2358 = vxpose.xlu0.c.b16.cont [5/8] 0, 128
    %2359 = vxpose.xlu0.c.b16.cont [6/8] 0, 128
    %2360 = vxpose.xlu0.c.b16.cont [7/8] 0, 128
    %2361 = vxpose.xlu0.c.b16.end [8/8] 0, 128
    %v2362 = vpop.trf.xlu0
    %v2363 = vpop.trf.xlu0
    %v2364 = vpop.trf.xlu0
    %v2365 = vpop.trf.xlu0
    %v2366 = vpop.trf.xlu0
    %v2367 = vpop.trf.xlu0
    %v2368 = vpop.trf.xlu0
    %v2369 = vpop.trf.xlu0
    %v2371 = vsel %vm2232, %v2362, 0
    %v2374 = vsel %vm2232, %v2363, 0
    %v2377 = vsel %vm2232, %v2364, 0
    %v2380 = vsel %vm2232, %v2365, 0
    %v2383 = vsel %vm2232, %v2366, 0
    %v2386 = vsel %vm2232, %v2367, 0
    %v2389 = vsel %vm2232, %v2368, 0
    %v2392 = vsel %vm2232, %v2369, 0
    %2394 = vmatprep.subr.bf16.mxu0 0
    %2395 = vmatpush1.bf16.msra.mxu0 0
    %2396 = vmatprep.subr.bf16.mxu0 0
    %2397 = vmatpush1.bf16.msra.mxu0 0
    %2398 = vmatprep.subr.bf16.mxu0 0
    %2399 = vmatpush1.bf16.msra.mxu0 0
    %2400 = vmatprep.subr.bf16.mxu0 0
    %2401 = vmatpush1.bf16.msra.mxu0 0
    %2402 = vmatprep.subr.bf16.mxu0 0
    %2403 = vmatpush1.bf16.msra.mxu0 0
    %2404 = vmatprep.subr.bf16.mxu0 0
    %2405 = vmatpush1.bf16.msra.mxu0 0
    %2406 = vmatprep.subr.bf16.mxu0 0
    %2407 = vmatpush1.bf16.msra.mxu0 0
    %2408 = vmatprep.subr.bf16.mxu0 0
    %2409 = vmatpush1.bf16.msra.mxu0 %v2215
    %2410 = vmatprep.subr.bf16.mxu0 0
    %2411 = vmatpush2.bf16.msra.mxu0 0
    %2412 = vmatprep.subr.bf16.mxu0 0
    %2413 = vmatpush2.bf16.msra.mxu0 0
    %2414 = vmatprep.subr.bf16.mxu0 0
    %2415 = vmatpush2.bf16.msra.mxu0 0
    %2416 = vmatprep.subr.bf16.mxu0 0
    %2417 = vmatpush2.bf16.msra.mxu0 0
    %2418 = vmatprep.subr.bf16.mxu0 0
    %2419 = vmatpush2.bf16.msra.mxu0 0
    %2420 = vmatprep.subr.bf16.mxu0 0
    %2421 = vmatpush2.bf16.msra.mxu0 0
    %2422 = vmatprep.subr.bf16.mxu0 0
    %2423 = vmatpush2.bf16.msra.mxu0 0
    %2424 = vmatprep.subr.bf16.mxu0 0
    %2425 = vmatpush2.bf16.msra.mxu0 0
    %2426 = vmatprep.mubr.bf16.mxu0 0
    %2427 = vmatmul.mubr.bf16.gmra.mxu0 %v2371
    %v2428 = vpop.f32.mrf.mxu0
    %v2429 = vadd.f32 0.0, %v2428
    %v2430 = vpop.f32.mrf.mxu0
    %v2431 = vpop.f32.mrf.mxu0
    %v2432 = vadd.f32 0.0, %v2431
    %v2433 = vpop.f32.mrf.mxu0
    %2434 = vmatprep.mubr.bf16.mxu0 0
    %2435 = vmatmul.mubr.bf16.gmra.mxu0 %v2374
    %v2436 = vpop.f32.mrf.mxu0
    %v2437 = vadd.f32 0.0, %v2436
    %v2438 = vpop.f32.mrf.mxu0
    %v2439 = vpop.f32.mrf.mxu0
    %v2440 = vadd.f32 0.0, %v2439
    %v2441 = vpop.f32.mrf.mxu0
    %2442 = vmatprep.mubr.bf16.mxu0 0
    %2443 = vmatmul.mubr.bf16.gmra.mxu0 %v2377
    %v2444 = vpop.f32.mrf.mxu0
    %v2445 = vadd.f32 0.0, %v2444
    %v2446 = vpop.f32.mrf.mxu0
    %v2447 = vpop.f32.mrf.mxu0
    %v2448 = vadd.f32 0.0, %v2447
    %v2449 = vpop.f32.mrf.mxu0
    %2450 = vmatprep.mubr.bf16.mxu0 0
    %2451 = vmatmul.mubr.bf16.gmra.mxu0 %v2380
    %v2452 = vpop.f32.mrf.mxu0
    %v2453 = vadd.f32 0.0, %v2452
    %v2454 = vpop.f32.mrf.mxu0
    %v2455 = vpop.f32.mrf.mxu0
    %v2456 = vadd.f32 0.0, %v2455
    %v2457 = vpop.f32.mrf.mxu0
    %2458 = vmatprep.mubr.bf16.mxu0 0
    %2459 = vmatmul.mubr.bf16.gmra.mxu0 %v2383
    %v2460 = vpop.f32.mrf.mxu0
    %v2461 = vadd.f32 0.0, %v2460
    %v2462 = vpop.f32.mrf.mxu0
    %v2463 = vpop.f32.mrf.mxu0
    %v2464 = vadd.f32 0.0, %v2463
    %v2465 = vpop.f32.mrf.mxu0
    %2466 = vmatprep.mubr.bf16.mxu0 0
    %2467 = vmatmul.mubr.bf16.gmra.mxu0 %v2386
    %v2468 = vpop.f32.mrf.mxu0
    %v2469 = vadd.f32 0.0, %v2468
    %v2470 = vpop.f32.mrf.mxu0
    %v2471 = vpop.f32.mrf.mxu0
    %v2472 = vadd.f32 0.0, %v2471
    %v2473 = vpop.f32.mrf.mxu0
    %2474 = vmatprep.mubr.bf16.mxu0 0
    %2475 = vmatmul.mubr.bf16.gmra.mxu0 %v2389
    %v2476 = vpop.f32.mrf.mxu0
    %v2477 = vadd.f32 0.0, %v2476
    %v2478 = vpop.f32.mrf.mxu0
    %v2479 = vpop.f32.mrf.mxu0
    %v2480 = vadd.f32 0.0, %v2479
    %v2481 = vpop.f32.mrf.mxu0
    %2482 = vmatprep.mubr.bf16.mxu0 0
    %2483 = vmatmul.mubr.bf16.gmra.mxu0 %v2392
    %v2484 = vpop.f32.mrf.mxu0
    %v2485 = vadd.f32 0.0, %v2484
    %v2486 = vpop.f32.mrf.mxu0
    %v2487 = vpop.f32.mrf.mxu0
    %v2488 = vadd.f32 0.0, %v2487
    %v2489 = vpop.f32.mrf.mxu0
    %2490 = vdwg.mxu0
    %v2491 = vmul.f32 %v2292, 0.0625
    %v2492 = vmul.f32 %v2295, 0.0625
    %v2493 = vmul.f32 %v2300, 0.0625
    %v2494 = vmul.f32 %v2303, 0.0625
    %v2495 = vmul.f32 %v2308, 0.0625
    %v2496 = vmul.f32 %v2311, 0.0625
    %v2497 = vmul.f32 %v2316, 0.0625
    %v2498 = vmul.f32 %v2319, 0.0625
    %v2499 = vmul.f32 %v2324, 0.0625
    %v2500 = vmul.f32 %v2327, 0.0625
    %v2501 = vmul.f32 %v2332, 0.0625
    %v2502 = vmul.f32 %v2335, 0.0625
    %v2503 = vmul.f32 %v2340, 0.0625
    %v2504 = vmul.f32 %v2343, 0.0625
    %v2505 = vmul.f32 %v2348, 0.0625
    %v2506 = vmul.f32 %v2351, 0.0625
    %v2507 = vmul.f32 %v2429, 0.0625
    %v2508 = vmul.f32 %v2432, 0.0625
    %v2509 = vmul.f32 %v2437, 0.0625
    %v2510 = vmul.f32 %v2440, 0.0625
    %v2511 = vmul.f32 %v2445, 0.0625
    %v2512 = vmul.f32 %v2448, 0.0625
    %v2513 = vmul.f32 %v2453, 0.0625
    %v2514 = vmul.f32 %v2456, 0.0625
    %v2515 = vmul.f32 %v2461, 0.0625
    %v2516 = vmul.f32 %v2464, 0.0625
    %v2517 = vmul.f32 %v2469, 0.0625
    %v2518 = vmul.f32 %v2472, 0.0625
    %v2519 = vmul.f32 %v2477, 0.0625
    %v2520 = vmul.f32 %v2480, 0.0625
    %v2521 = vmul.f32 %v2485, 0.0625
    %v2522 = vmul.f32 %v2488, 0.0625
    %2523 = vst [vmem:[%s3] sm:$0xff] %v2491
    %2524 = vst [vmem:[%s3 + $0x8] sm:$0xff] %v2492
    %2525 = vst [vmem:[%s3 + $0x10] sm:$0xff] %v2493
    %2526 = vst [vmem:[%s3 + $0x18] sm:$0xff] %v2494
    %2527 = vst [vmem:[%s3 + $0x20] sm:$0xff] %v2495
    %2528 = vst [vmem:[%s3 + $0x28] sm:$0xff] %v2496
    %2529 = vst [vmem:[%s3 + $0x30] sm:$0xff] %v2497
    %2530 = vst [vmem:[%s3 + $0x38] sm:$0xff] %v2498
    %2531 = vst [vmem:[%s3 + $0x40] sm:$0xff] %v2499
    %2532 = vst [vmem:[%s3 + $0x48] sm:$0xff] %v2500
    %2533 = vst [vmem:[%s3 + $0x50] sm:$0xff] %v2501
    %2534 = vst [vmem:[%s3 + $0x58] sm:$0xff] %v2502
    %2535 = vst [vmem:[%s3 + $0x60] sm:$0xff] %v2503
    %2536 = vst [vmem:[%s3 + $0x68] sm:$0xff] %v2504
    %2537 = vst [vmem:[%s3 + $0x70] sm:$0xff] %v2505
    %2538 = vst [vmem:[%s3 + $0x78] sm:$0xff] %v2506
    %2539 = vst [vmem:[%s3 + $0x80] sm:$0xff] %v2507
    %2540 = vst [vmem:[%s3 + $0x88] sm:$0xff] %v2508
    %2541 = vst [vmem:[%s3 + $0x90] sm:$0xff] %v2509
    %2542 = vst [vmem:[%s3 + $0x98] sm:$0xff] %v2510
    %2543 = vst [vmem:[%s3 + $0xa0] sm:$0xff] %v2511
    %2544 = vst [vmem:[%s3 + $0xa8] sm:$0xff] %v2512
    %2545 = vst [vmem:[%s3 + $0xb0] sm:$0xff] %v2513
    %2546 = vst [vmem:[%s3 + $0xb8] sm:$0xff] %v2514
    %2547 = vst [vmem:[%s3 + $0xc0] sm:$0xff] %v2515
    %2548 = vst [vmem:[%s3 + $0xc8] sm:$0xff] %v2516
    %2549 = vst [vmem:[%s3 + $0xd0] sm:$0xff] %v2517
    %2550 = vst [vmem:[%s3 + $0xd8] sm:$0xff] %v2518
    %2551 = vst [vmem:[%s3 + $0xe0] sm:$0xff] %v2519
    %2552 = vst [vmem:[%s3 + $0xe8] sm:$0xff] %v2520
    %2553 = vst [vmem:[%s3 + $0xf0] sm:$0xff] %v2521
    %2554 = vst [vmem:[%s3 + $0xf8] sm:$0xff] %v2522
    // Predicated region
    $region10: #{dcam_sce_forward.1} parent=1 // pred_check
      _
    $region11: #{dcam_sce_forward.1} parent=1 // pred_check_branch
      %2556 = sbr.rel (0) target = $region13
    $region12: #{dcam_sce_forward.1} parent=1 // pred_region
      %s2558 = ssub.s32 32, 32
      %2559 = vsyncadd [#allocation3], %s2558
      %s2560 = sshll.u32 [#allocation2], 4
      %s2561 = int_to_ptr.vmem [resolvable:$true] %s2560
      %2566 = dma.vmem_to_hbm [thread:$0]  %s2561, 32, %s2, [#allocation3], 16, 16, 1
    $region13: #{dcam_sce_forward.1} parent=1 // pred_fallthru
      _
    // Predicated region
    $region14: #{dcam_sce_forward.1} parent=1 // pred_check
      _
    $region15: #{dcam_sce_forward.1} parent=1 // pred_check_branch
      %2568 = sbr.rel (0) target = $region17
    $region16: #{dcam_sce_forward.1} parent=1 // pred_region
      _
    $region17: #{dcam_sce_forward.1} parent=1 // pred_fallthru
      _
    // Predicated region
    $region18: #{dcam_sce_forward.1} parent=1 // pred_check
      _
    $region19: #{dcam_sce_forward.1} parent=1 // pred_check_branch
      %2570 = sbr.rel (0) target = $region21
    $region20: #{dcam_sce_forward.1} parent=1 // pred_region
      %2571 = dma.done [#allocation3], 32
    $region21: #{dcam_sce_forward.1} parent=1 // pred_fallthru
      _
    // Predicated region
    $region22: #{dcam_sce_forward.1} parent=1 // pred_check
      _
    $region23: #{dcam_sce_forward.1} parent=1 // pred_check_branch
      %2573 = sbr.rel (0) target = $region25
    $region24: #{dcam_sce_forward.1} parent=1 // pred_region
      _
    $region25: #{dcam_sce_forward.1} parent=1 // pred_fallthru
      _
    %2574 = vsyncpa [#allocation3], 1

</llo_original>
